<compile_context>
chip_gen: v7x
topology: tpu7x:2x2x1
jax: 0.10.0
libtpu: 0.0.40
codegen_flags: <defaults>
</compile_context>

<pallas_src>
import functools

import jax
import jax.numpy as jnp
from jax.experimental import pallas as pl
from jax.experimental.pallas import tpu as pltpu


def _round_up(x, m):
    return ((x + m - 1) // m) * m


def _cdiv(a, b):
    return -(-a // b)


# -----------------------------------------------------------------------------
# Kernel
# -----------------------------------------------------------------------------
def _model_kernel(x_ref, w_ref, out_ref, *, m):
    f32 = jnp.float32
    E, R, S = m["E"], m["R"], m["S"]
    H_rp, H_p, H_rf, Hk = m["H_rp"], m["H_p"], m["H_rf"], m["Hk"]
    pg = H_rf                      # start of parameter-net group in packed hidden
    # packed hidden column groups: [rf: 0..H_rf) | p: pg..pg+H_p) | ef: rest)

    x = x_ref[...]                                         # [TB, 2+E], one stream
    temperature = x[:, 0:1]
    entropy = x[:, 1:2]

    # ---- dot1: fused first layers (temperature/entropy weight rows are 0) ----
    w1 = w_ref[m["o_w1"]:m["o_w1"] + 2 + E, :H_rp + Hk]
    b1 = w_ref[m["o_b1"]:m["o_b1"] + 1, :H_rp + Hk]
    h01 = jnp.dot(x, w1, preferred_element_type=f32) + b1
    h_rp = jnp.maximum(h01[:, :H_rp], 0.0)                 # ref_parameter_net hidden
    part1 = h01[:, H_rp:]                                  # packed [rf | p | ef] partial

    # ---- dot2: ref_parameter_net L2 + host-folded chain into parameter_net L1
    #      columns: [chain in p-group (Hk) | p_ref (R) | temperature0 (1)]
    w2 = w_ref[m["o_w2"]:m["o_w2"] + H_rp, :Hk + R + 1]
    b2 = w_ref[m["o_b2"]:m["o_b2"] + 1, :Hk + R + 1]
    r2 = jnp.dot(h_rp, w2, preferred_element_type=f32) + b2
    p_ref = r2[:, Hk:Hk + R]
    t0 = r2[:, Hk + R:Hk + R + 1]

    # ---- packed-hidden preactivation; rank-1 feature nets stay on the VPU ----
    rf1 = w_ref[m["o_rf1"]:m["o_rf1"] + 1, :Hk]            # [rfw1 | 0 | 0]
    ef1 = w_ref[m["o_ef1"]:m["o_ef1"] + 1, :Hk]            # [0 | 0 | efw1]
    t_ratio = temperature * pl.reciprocal(t0, approx=False)
    pre0 = part1 + r2[:, :Hk] + t_ratio * rf1              # ef-group still lacks e-term

    # entropy0 via broadcast-mul + lane reduce (keeps it off the MXU chain)
    h_p = jnp.maximum(pre0[:, pg:pg + H_p], 0.0)
    pw2s = w_ref[m["o_scale"]:m["o_scale"] + 1, :H_p]
    pb2s = w_ref[m["o_scale"]:m["o_scale"] + 1, H_p:H_p + 1]
    e0 = jnp.sum(h_p * pw2s, axis=1, keepdims=True) + pb2s

    e_ratio = entropy * pl.reciprocal(e0, approx=False)
    h_all = jnp.maximum(pre0 + e_ratio * ef1, 0.0)         # [h_rf | h_p | h_ef]

    # ---- dot3: block-diagonal tail -> [x_ref (R) | p_ent (S) | x_ent (S)] ----
    wt = w_ref[m["o_wt"]:m["o_wt"] + Hk, :R + 2 * S]
    bt = w_ref[m["o_bt"]:m["o_bt"] + 1, :R + 2 * S]
    tail = jnp.dot(h_all, wt, preferred_element_type=f32) + bt
    xr = tail[:, :R]
    p_ent = tail[:, R:R + S]
    x_ent = tail[:, R + S:R + 2 * S]

    # ---- combine: M=1 dots contracting the feature axis so the per-tile
    #      result lands lane-dense as a [1, TB] row (no transpose needed). ----
    dn = (((1,), (1,)), ((), ()))
    v = jax.lax.dot_general(jnp.ones((1, R), f32), p_ref * xr, dn,
                            preferred_element_type=f32)
    v = v + jax.lax.dot_general(jnp.ones((1, S), f32), p_ent * x_ent, dn,
                                preferred_element_type=f32)
    out_ref[...] = v.astype(out_ref.dtype)


# -----------------------------------------------------------------------------
# One-time weight packing (item "hoist weight plumbing off the per-call path")
# -----------------------------------------------------------------------------
def pack_params(params, emb_size, ref_feat, ent_feat):
    f32 = jnp.float32
    E, R, S = emb_size, ref_feat, ent_feat
    rpw1 = params["rpw1"].astype(f32); rpb1 = params["rpb1"].astype(f32)
    rpw2 = params["rpw2"].astype(f32); rpb2 = params["rpb2"].astype(f32)
    rfw1 = params["rfw1"].astype(f32); rfb1 = params["rfb1"].astype(f32)
    rfw2 = params["rfw2"].astype(f32); rfb2 = params["rfb2"].astype(f32)
    pw1 = params["pw1"].astype(f32);  pb1 = params["pb1"].astype(f32)
    pw2 = params["pw2"].astype(f32);  pb2 = params["pb2"].astype(f32)
    efw1 = params["efw1"].astype(f32); efb1 = params["efb1"].astype(f32)
    efw2 = params["efw2"].astype(f32); efb2 = params["efb2"].astype(f32)

    H_rp, H_p = rpw1.shape[1], pw1.shape[1]
    H_rf, H_ef = rfw1.shape[1], efw1.shape[1]
    Hk = H_rf + H_p + H_ef
    pg, eg = H_rf, H_rf + H_p                         # p-group / ef-group offsets

    rpw2f, rpw2s = rpw2[:, :R], rpw2[:, R:R + 1]
    rpb2f, rpb2s = rpb2[:, :R], rpb2[:, R:R + 1]
    pw1e, pw1r = pw1[:E], pw1[E:]
    pw2f, pw2s = pw2[:, :S], pw2[:, S:S + 1]
    pb2f, pb2s = pb2[:, :S], pb2[:, S:S + 1]

    # Chain folding: p_ref @ pw1r == h_rp @ (rpw2f @ pw1r) + rpb2f @ pw1r.
    w_chain = rpw2f @ pw1r                            # [H_rp, H_p]
    b_chain = rpb2f @ pw1r                            # [1, H_p]

    # dot1 weight (rows 0/1 = temperature/entropy -> zero)
    w1 = jnp.zeros((2 + E, H_rp + Hk), f32)
    w1 = w1.at[2:, :H_rp].set(rpw1)
    w1 = w1.at[2:, H_rp + pg:H_rp + pg + H_p].set(pw1e)
    b1 = jnp.zeros((1, H_rp + Hk), f32)
    b1 = b1.at[:, :H_rp].set(rpb1)
    b1 = b1.at[:, H_rp:H_rp + H_rf].set(rfb1)
    b1 = b1.at[:, H_rp + pg:H_rp + pg + H_p].set(pb1 + b_chain)
    b1 = b1.at[:, H_rp + eg:].set(efb1)

    # dot2 weight: [chain (in p-group of Hk) | p_ref (R) | temperature0 (1)]
    w2 = jnp.zeros((H_rp, Hk + R + 1), f32)
    w2 = w2.at[:, pg:pg + H_p].set(w_chain)
    w2 = w2.at[:, Hk:Hk + R].set(rpw2f)
    w2 = w2.at[:, Hk + R:].set(rpw2s)
    b2 = jnp.zeros((1, Hk + R + 1), f32)
    b2 = b2.at[:, Hk:Hk + R].set(rpb2f)
    b2 = b2.at[:, Hk + R:].set(rpb2s)

    # rank-1 feature-net rows over the packed hidden
    rf1 = jnp.zeros((1, Hk), f32).at[:, :H_rf].set(rfw1)
    ef1 = jnp.zeros((1, Hk), f32).at[:, eg:].set(efw1)
    scale = jnp.zeros((1, H_p + 1), f32)
    scale = scale.at[:, :H_p].set(pw2s.T)             # entropy0 weight row
    scale = scale.at[:, H_p:].set(pb2s)               # entropy0 bias scalar

    # block-diagonal tail: [x_ref (R) | p_ent (S) | x_ent (S)]
    wt = jnp.zeros((Hk, R + 2 * S), f32)
    wt = wt.at[:H_rf, :R].set(rfw2)
    wt = wt.at[pg:pg + H_p, R:R + S].set(pw2f)
    wt = wt.at[eg:, R + S:].set(efw2)
    bt = jnp.concatenate([rfb2, pb2f, efb2], axis=1)

    segs = [("w1", w1), ("b1", b1), ("w2", w2), ("b2", b2),
            ("rf1", rf1), ("ef1", ef1), ("scale", scale),
            ("wt", wt), ("bt", bt)]
    wcol = _round_up(max(a.shape[1] for _, a in segs), 128)
    offs, row = {}, 0
    for name, a in segs:                              # 8-row-aligned segments
        offs["o_" + name] = row
        row += _round_up(a.shape[0], 8)
    packed = jnp.zeros((row, wcol), f32)
    for name, a in segs:
        o = offs["o_" + name]
        packed = packed.at[o:o + a.shape[0], :a.shape[1]].set(a)

    meta = dict(E=E, R=R, S=S, H_rp=H_rp, H_p=H_p, H_rf=H_rf, H_ef=H_ef, Hk=Hk,
                **offs)
    return packed, meta


# -----------------------------------------------------------------------------
# Forward wrapper
# -----------------------------------------------------------------------------
def _choose_tile(batch, batch_tile):
    tb = min(batch_tile, _round_up(batch, 128))
    # Keep >= 2 grid steps when the batch allows it so ("parallel",) can shard
    # across the two TensorCores on v7x.
    if batch > 256 and _cdiv(batch, tb) < 2:
        tb = _round_up(_cdiv(batch, 2), 128)
    return max(128, _round_up(tb, 128))


def model0_ci_norm2_forward(x_in, packed, meta, *, batch_tile=2048):
    """x_in: [B, 2 + emb_size] float32.  Returns [B, 1] float32."""
    f32 = jnp.float32
    E = meta["E"]
    batch = x_in.shape[0]
    x = x_in[:, :2 + E].astype(f32)

    tb = _choose_tile(batch, batch_tile)
    padded = _round_up(batch, tb)
    if padded != batch:
        # edge-mode padding keeps the (discarded) pad rows finite (no 0-divides).
        x = jnp.pad(x, ((0, padded - batch), (0, 0)), mode="edge")
    grid = (padded // tb,)
    wp_rows, wp_cols = packed.shape

    # TODO(synk): optional bf16 streaming of the embedding columns (bandwidth
    # win on v5e/v6e); kept f32 here to hold the tight reference tolerance.
    # TODO(synk): transposed (features-on-sublanes, batch-on-lanes) variant for
    # v7x if the caller can produce x as [2+E, B].
    out = pl.pallas_call(
        functools.partial(_model_kernel, m=meta),
        grid=grid,
        in_specs=[
            pl.BlockSpec((tb, 2 + E), lambda i: (i, 0)),          # fused x stream
            pl.BlockSpec((wp_rows, wp_cols), lambda i: (0, 0)),   # packed weights
        ],
        out_specs=pl.BlockSpec((1, tb), lambda i: (0, i)),        # lane-dense out
        out_shape=jax.ShapeDtypeStruct((1, padded), f32),
        compiler_params=pltpu.CompilerParams(
            dimension_semantics=("parallel",),
            vmem_limit_bytes=32 * 1024 * 1024,
        ),
    )(x, packed)
    return out[0, :batch][:, None]


# -----------------------------------------------------------------------------
# Parameter init + pure-JAX reference (mirrors the PyTorch forward)
# -----------------------------------------------------------------------------
def _init_linear(key, in_dim, out_dim):
    kw, kb = jax.random.split(key)
    w = jax.random.normal(kw, (in_dim, out_dim), jnp.float32) * 0.3
    b = jax.random.normal(kb, (1, out_dim), jnp.float32) * 0.1
    return w, b


def make_params(key, emb_size, ref_feat, ent_feat, hidden):
    keys = jax.random.split(key, 8)
    p = {}
    p["rpw1"], p["rpb1"] = _init_linear(keys[0], emb_size, hidden)
    p["rpw2"], p["rpb2"] = _init_linear(keys[1], hidden, ref_feat + 1)
    p["rfw1"], p["rfb1"] = _init_linear(keys[2], 1, hidden)
    p["rfw2"], p["rfb2"] = _init_linear(keys[3], hidden, ref_feat)
    p["pw1"], p["pb1"] = _init_linear(keys[4], emb_size + ref_feat, hidden)
    p["pw2"], p["pb2"] = _init_linear(keys[5], hidden, ent_feat + 1)
    p["efw1"], p["efb1"] = _init_linear(keys[6], 1, hidden)
    p["efw2"], p["efb2"] = _init_linear(keys[7], hidden, ent_feat)
    # Bias temperature0 / entropy0 away from zero so the divisions are
    # well-conditioned (init choice only; forward semantics unchanged).
    p["rpb2"] = p["rpb2"].at[0, ref_feat].set(1.0)
    p["pb2"] = p["pb2"].at[0, ent_feat].set(1.0)
    return p


def _reference_forward(x_in, p, emb_size, ref_feat, ent_feat):
    temperature, entropy, embedding = x_in[:, 0:1], x_in[:, 1:2], x_in[:, 2:]
    relu = lambda v: jnp.maximum(v, 0.0)
    rp = relu(embedding @ p["rpw1"] + p["rpb1"]) @ p["rpw2"] + p["rpb2"]
    p_ref, t0 = rp[:, :ref_feat], rp[:, ref_feat:]
    x_ref = relu((temperature / t0) @ p["rfw1"] + p["rfb1"]) @ p["rfw2"] + p["rfb2"]
    p_in = jnp.concatenate([embedding, p_ref], axis=1)
    pe = relu(p_in @ p["pw1"] + p["pb1"]) @ p["pw2"] + p["pb2"]
    p_ent, e0 = pe[:, :ent_feat], pe[:, ent_feat:]
    x_ent = relu((entropy / e0) @ p["efw1"] + p["efb1"]) @ p["efw2"] + p["efb2"]
    v_ent = jnp.sum(p_ent * x_ent, axis=1)
    v_ref = jnp.sum(p_ref * x_ref, axis=1)
    return (v_ent + v_ref)[:, None]


if __name__ == "__main__":
    EMB = 32    # embedding_size
    REF = 8     # ref_feature_size
    ENT = 8     # entropy_feature_size
    HID = 32    # hidden units of every inner layer
    BATCH = 300  # not a tile multiple -> exercises edge padding + a 2-step grid

    key = jax.random.PRNGKey(0)
    k_x, k_p = jax.random.split(key)
    x_in = jax.random.normal(k_x, (BATCH, 2 + EMB), jnp.float32)
    # Keep temperature/entropy positive-ish, like physical inputs.
    x_in = x_in.at[:, 0:2].set(jnp.abs(x_in[:, 0:2]) + 0.5)

    params = make_params(k_p, EMB, REF, ENT, HID)
    packed, meta = pack_params(params, EMB, REF, ENT)   # one-time, off the call path

    out = model0_ci_norm2_forward(x_in, packed, meta, batch_tile=2048)
    out = jax.block_until_ready(out)

    ref = _reference_forward(x_in, params, EMB, REF, ENT)
    assert out.shape == (BATCH, 1)
    max_err = jnp.max(jnp.abs(out - ref))
    assert jnp.allclose(out, ref, rtol=1e-3, atol=1e-3), (max_err, out[:4], ref[:4])
    print("KERNEL_OK")
</pallas_src>

<mosaic_0001>
module attributes {stable_mosaic.version = 11 : i64} {
  func.func @_model_kernel(%arg0: i32, %arg1: memref<256x34xf32, #tpu.memory_space<vmem>>, %arg2: memref<216x128xf32, #tpu.memory_space<vmem>>, %arg3: memref<1x256xf32, #tpu.memory_space<vmem>>) attributes {dimension_semantics = [#tpu.dimension_semantics<parallel>], iteration_bounds = array<i64: 2>, scalar_prefetch = 0 : i64, scratch_operands = 0 : i64, tpu.core_type = #tpu.core_type<tc>, window_params = [{transform_indices = @transform_0, window_bounds = array<i64: 256, 34>}, {pipeline_mode = #tpu.pipeline_mode<synchronous>, transform_indices = @transform_1, window_bounds = array<i64: 216, 128>}, {transform_indices = @transform_2, window_bounds = array<i64: 1, 256>}]} {
    %c0 = arith.constant 0 : index
    %c0_0 = arith.constant 0 : index
    %0 = vector.load %arg1[%c0, %c0_0] : memref<256x34xf32, #tpu.memory_space<vmem>>, vector<256x34xf32>
    %1 = vector.extract_strided_slice %0 {offsets = [0, 0], sizes = [256, 1], strides = [1, 1]} : vector<256x34xf32> to vector<256x1xf32>
    %2 = vector.extract_strided_slice %0 {offsets = [0, 1], sizes = [256, 1], strides = [1, 1]} : vector<256x34xf32> to vector<256x1xf32>
    %c0_1 = arith.constant 0 : index
    %c0_2 = arith.constant 0 : index
    %3 = vector.load %arg2[%c0_1, %c0_2] : memref<216x128xf32, #tpu.memory_space<vmem>>, vector<34x128xf32>
    %c40 = arith.constant 40 : index
    %c0_3 = arith.constant 0 : index
    %4 = vector.load %arg2[%c40, %c0_3] : memref<216x128xf32, #tpu.memory_space<vmem>>, vector<1x128xf32>
    %cst = arith.constant dense<0.000000e+00> : vector<256x128xf32>
    %5 = tpu.matmul %0, %3, %cst {dimension_numbers = #tpu.dot_dimension_numbers<[1], [0], [0], [1], [0, 0, 1, 1], [], []>} : vector<256x34xf32>, vector<34x128xf32>, vector<256x128xf32> -> vector<256x128xf32>
    %6 = vector.broadcast %4 : vector<1x128xf32> to vector<256x128xf32>
    %7 = arith.addf %5, %6 : vector<256x128xf32>
    %8 = vector.extract_strided_slice %7 {offsets = [0, 0], sizes = [256, 32], strides = [1, 1]} : vector<256x128xf32> to vector<256x32xf32>
    %cst_4 = arith.constant 0.000000e+00 : f32
    %9 = vector.broadcast %cst_4 : f32 to vector<256x32xf32>
    %10 = arith.maximumf %8, %9 : vector<256x32xf32>
    %11 = vector.extract_strided_slice %7 {offsets = [0, 32], sizes = [256, 96], strides = [1, 1]} : vector<256x128xf32> to vector<256x96xf32>
    %c48 = arith.constant 48 : index
    %c0_5 = arith.constant 0 : index
    %12 = vector.load %arg2[%c48, %c0_5] : memref<216x128xf32, #tpu.memory_space<vmem>>, vector<32x105xf32>
    %c80 = arith.constant 80 : index
    %c0_6 = arith.constant 0 : index
    %13 = vector.load %arg2[%c80, %c0_6] : memref<216x128xf32, #tpu.memory_space<vmem>>, vector<1x105xf32>
    %cst_7 = arith.constant dense<0.000000e+00> : vector<256x105xf32>
    %14 = tpu.matmul %10, %12, %cst_7 {dimension_numbers = #tpu.dot_dimension_numbers<[1], [0], [0], [1], [0, 0, 1, 1], [], []>} : vector<256x32xf32>, vector<32x105xf32>, vector<256x105xf32> -> vector<256x105xf32>
    %15 = vector.broadcast %13 : vector<1x105xf32> to vector<256x105xf32>
    %16 = arith.addf %14, %15 : vector<256x105xf32>
    %17 = vector.extract_strided_slice %16 {offsets = [0, 96], sizes = [256, 8], strides = [1, 1]} : vector<256x105xf32> to vector<256x8xf32>
    %18 = vector.extract_strided_slice %16 {offsets = [0, 104], sizes = [256, 1], strides = [1, 1]} : vector<256x105xf32> to vector<256x1xf32>
    %c88 = arith.constant 88 : index
    %c0_8 = arith.constant 0 : index
    %19 = vector.load %arg2[%c88, %c0_8] : memref<216x128xf32, #tpu.memory_space<vmem>>, vector<1x96xf32>
    %c96 = arith.constant 96 : index
    %c0_9 = arith.constant 0 : index
    %20 = vector.load %arg2[%c96, %c0_9] : memref<216x128xf32, #tpu.memory_space<vmem>>, vector<1x96xf32>
    %21 = tpu.reciprocal %18 : vector<256x1xf32> -> vector<256x1xf32>
    %22 = arith.mulf %1, %21 : vector<256x1xf32>
    %23 = vector.extract_strided_slice %16 {offsets = [0, 0], sizes = [256, 96], strides = [1, 1]} : vector<256x105xf32> to vector<256x96xf32>
    %24 = arith.addf %11, %23 : vector<256x96xf32>
    %25 = vector.broadcast %22 : vector<256x1xf32> to vector<256x96xf32>
    %26 = vector.broadcast %19 : vector<1x96xf32> to vector<256x96xf32>
    %27 = arith.mulf %25, %26 : vector<256x96xf32>
    %28 = arith.addf %24, %27 : vector<256x96xf32>
    %29 = vector.extract_strided_slice %28 {offsets = [0, 32], sizes = [256, 32], strides = [1, 1]} : vector<256x96xf32> to vector<256x32xf32>
    %cst_10 = arith.constant 0.000000e+00 : f32
    %30 = vector.broadcast %cst_10 : f32 to vector<256x32xf32>
    %31 = arith.maximumf %29, %30 : vector<256x32xf32>
    %c104 = arith.constant 104 : index
    %c0_11 = arith.constant 0 : index
    %32 = vector.load %arg2[%c104, %c0_11] : memref<216x128xf32, #tpu.memory_space<vmem>>, vector<1x32xf32>
    %c104_12 = arith.constant 104 : index
    %c32 = arith.constant 32 : index
    %33 = vector.load %arg2[%c104_12, %c32] : memref<216x128xf32, #tpu.memory_space<vmem>>, vector<1x1xf32>
    %34 = vector.broadcast %32 : vector<1x32xf32> to vector<256x32xf32>
    %35 = arith.mulf %31, %34 : vector<256x32xf32>
    %cst_13 = arith.constant dense<0.000000e+00> : vector<256xf32>
    %36 = vector.multi_reduction <add>, %35, %cst_13 [1] : vector<256x32xf32> to vector<256xf32>
    %37 = vector.shape_cast %36 : vector<256xf32> to vector<256x1xf32>
    %38 = vector.broadcast %33 : vector<1x1xf32> to vector<256x1xf32>
    %39 = arith.addf %37, %38 : vector<256x1xf32>
    %40 = tpu.reciprocal %39 : vector<256x1xf32> -> vector<256x1xf32>
    %41 = arith.mulf %2, %40 : vector<256x1xf32>
    %42 = vector.broadcast %41 : vector<256x1xf32> to vector<256x96xf32>
    %43 = vector.broadcast %20 : vector<1x96xf32> to vector<256x96xf32>
    %44 = arith.mulf %42, %43 : vector<256x96xf32>
    %45 = arith.addf %28, %44 : vector<256x96xf32>
    %cst_14 = arith.constant 0.000000e+00 : f32
    %46 = vector.broadcast %cst_14 : f32 to vector<256x96xf32>
    %47 = arith.maximumf %45, %46 : vector<256x96xf32>
    %c112 = arith.constant 112 : index
    %c0_15 = arith.constant 0 : index
    %48 = vector.load %arg2[%c112, %c0_15] : memref<216x128xf32, #tpu.memory_space<vmem>>, vector<96x24xf32>
    %c208 = arith.constant 208 : index
    %c0_16 = arith.constant 0 : index
    %49 = vector.load %arg2[%c208, %c0_16] : memref<216x128xf32, #tpu.memory_space<vmem>>, vector<1x24xf32>
    %cst_17 = arith.constant dense<0.000000e+00> : vector<256x24xf32>
    %50 = tpu.matmul %47, %48, %cst_17 {dimension_numbers = #tpu.dot_dimension_numbers<[1], [0], [0], [1], [0, 0, 1, 1], [], []>} : vector<256x96xf32>, vector<96x24xf32>, vector<256x24xf32> -> vector<256x24xf32>
    %51 = vector.broadcast %49 : vector<1x24xf32> to vector<256x24xf32>
    %52 = arith.addf %50, %51 : vector<256x24xf32>
    %53 = vector.extract_strided_slice %52 {offsets = [0, 0], sizes = [256, 8], strides = [1, 1]} : vector<256x24xf32> to vector<256x8xf32>
    %54 = vector.extract_strided_slice %52 {offsets = [0, 8], sizes = [256, 8], strides = [1, 1]} : vector<256x24xf32> to vector<256x8xf32>
    %55 = vector.extract_strided_slice %52 {offsets = [0, 16], sizes = [256, 8], strides = [1, 1]} : vector<256x24xf32> to vector<256x8xf32>
    %cst_18 = arith.constant 1.000000e+00 : f32
    %56 = vector.broadcast %cst_18 : f32 to vector<1x8xf32>
    %57 = arith.mulf %17, %53 : vector<256x8xf32>
    %cst_19 = arith.constant dense<0.000000e+00> : vector<1x256xf32>
    %58 = tpu.matmul %56, %57, %cst_19 {dimension_numbers = #tpu.dot_dimension_numbers<[1], [1], [0], [0], [0, 0, 1, 0], [], []>} : vector<1x8xf32>, vector<256x8xf32>, vector<1x256xf32> -> vector<1x256xf32>
    %cst_20 = arith.constant 1.000000e+00 : f32
    %59 = vector.broadcast %cst_20 : f32 to vector<1x8xf32>
    %60 = arith.mulf %54, %55 : vector<256x8xf32>
    %cst_21 = arith.constant dense<0.000000e+00> : vector<1x256xf32>
    %61 = tpu.matmul %59, %60, %cst_21 {dimension_numbers = #tpu.dot_dimension_numbers<[1], [1], [0], [0], [0, 0, 1, 0], [], []>} : vector<1x8xf32>, vector<256x8xf32>, vector<1x256xf32> -> vector<1x256xf32>
    %62 = arith.addf %58, %61 : vector<1x256xf32>
    %c0_22 = arith.constant 0 : index
    %c0_23 = arith.constant 0 : index
    %63 = vector.load %arg3[%c0_22, %c0_23] : memref<1x256xf32, #tpu.memory_space<vmem>>, vector<1x256xf32>
    tpu.vector_store %arg3[%c0_22, %c0_23], %62 {strides = array<i32>} : memref<1x256xf32, #tpu.memory_space<vmem>>, vector<1x256xf32>,
    return
  }
  func.func @transform_0(%arg0: i32) -> (i32, i32) {
    %c0_i32 = arith.constant 0 : i32
    %c0_i32_0 = arith.constant 0 : i32
    return %arg0, %c0_i32 : i32, i32
  }
  func.func @transform_1(%arg0: i32) -> (i32, i32) {
    %c0_i32 = arith.constant 0 : i32
    %c0_i32_0 = arith.constant 0 : i32
    %c0_i32_1 = arith.constant 0 : i32
    return %c0_i32, %c0_i32_0 : i32, i32
  }
  func.func @transform_2(%arg0: i32) -> (i32, i32) {
    %c0_i32 = arith.constant 0 : i32
    %c0_i32_0 = arith.constant 0 : i32
    return %c0_i32, %arg0 : i32, i32
  }
}

</mosaic_0001>

<llo_original>
// kernel: tpu_custom_call.1
$region0: #{tpu_custom_call.1}
  #allocation0 [shape = 'u32[]', space=smem, size = 0x4, offset = 0x4, fixed_abs, tag = 'smem constant byte address 0x4 - core index']
  #allocation1 [shape = 'u32[144,128]{1,0:T(1,128)}', space=vmem, size = 0x12000, scoped, tag = 'internal scratch']
  %s0 = inlined_call_operand.vmem [shape: f32[512,34], index: 0, kind: input, shape index: {}]
  %s1 = inlined_call_operand.vmem [shape: f32[216,128], index: 1, kind: input, shape index: {}]
  %s2 = inlined_call_operand.hbm [shape: f32[1,512], index: 2, kind: output, shape index: {}]
  %s3 = sld [smem:[#allocation0]]
  $region41: #{tpu_custom_call.1} parent=0
    _
  %s5 = ssub.s32 1, %s3
  %s6 = scalar_select 0, %s5, %s3
  $region1: #{tpu_custom_call.1} parent=0
    #allocation2 [shape = 'u8[2048]{0}', space=vmem, size = 0x800, scoped, tag = 'output window, operand 0']
    #allocation3 [shape = 's32[2]{0}', space=sflag, size = 0x8, scoped, tag = 'scoped memory for tpu_custom_call.1']
    %7 = vsyncpa [#allocation3], 0
    %s8 = scalar_lea.sflag [#allocation3], 1
    %9 = vsyncpa %s8, 0
    loop: start=0, step=1, limit=4
    $region2: #{tpu_custom_call.1} parent=1 // loop_pre_header
      _
    $region3: #{tpu_custom_call.1} parent=1 // loop_header
      %s11 = sphi 0, %s15
      %p12 = scmp.ge.s32.totalorder %s11, 4
      %s21 = sphi 0, %s23
      %s24 = sphi 0, %s21
      %s25 = sphi 0, %s24
      %s41 = sphi 0, %s25
      %s45 = sphi 0, %s45
      %s47 = sphi 0, %s45
      %s48 = sphi 0, %s47
      %s62 = sphi 0, %s48
      %s68 = sphi 0, %s70
      %s71 = sphi 0, %s68
      %s72 = sphi 0, %s71
      %s88 = sphi 0, %s72
    $region4: #{tpu_custom_call.1} parent=1 // loop_header_branch
      %14 = sbr.rel (%p12) target = $region8
    $region5: #{tpu_custom_call.1} parent=1 // loop_body
      %s16 = ssub.s32 %s11, 1
      %s17 = ssub.s32 %s11, 2
      %s18 = sadd.s32 %s11, 1
      %s19 = ssub.s32 %s11, %s18
      %p20 = scmp.eq.s32.totalorder %s19, 0
      %s22 = sadd.s32 %s21, 1
      %s23 = scalar_select %p20, %s21, %s22
      %p26 = pneg %p20
      %p27 = scmp.eq.s32.totalorder %s11, 1
      %p28 = por %p26, %p27
      %p29 = scmp.ne.s32.totalorder %s21, %s24
      %p30 = scmp.eq.s32.totalorder %s11, 0
      %p31 = por %p29, %p30
      %p32 = scmp.ne.s32.totalorder %s21, %s24
      %p33 = scmp.eq.s32.totalorder %s16, 1
      %p34 = por %p32, %p33
      %p35 = scmp.ne.s32.totalorder %s24, %s25
      %p36 = scmp.eq.s32.totalorder %s16, 0
      %p37 = por %p35, %p36
      %p38 = scmp.ne.s32.totalorder %s24, %s25
      %p39 = scmp.eq.s32.totalorder %s17, 1
      %p40 = por %p38, %p39
      %p42 = scmp.ne.s32.totalorder %s25, %s41
      %p43 = scmp.eq.s32.totalorder %s17, 0
      %p44 = por %p42, %p43
      %s46 = sadd.s32 %s45, 1
      %p49 = scmp.eq.s32.totalorder %s11, 1
      %p50 = scmp.ne.s32.totalorder %s45, %s47
      %p51 = scmp.eq.s32.totalorder %s11, 0
      %p52 = por %p50, %p51
      %p53 = scmp.ne.s32.totalorder %s45, %s47
      %p54 = scmp.eq.s32.totalorder %s16, 1
      %p55 = por %p53, %p54
      %p56 = scmp.ne.s32.totalorder %s47, %s48
      %p57 = scmp.eq.s32.totalorder %s16, 0
      %p58 = por %p56, %p57
      %p59 = scmp.ne.s32.totalorder %s47, %s48
      %p60 = scmp.eq.s32.totalorder %s17, 1
      %p61 = por %p59, %p60
      %p63 = scmp.ne.s32.totalorder %s48, %s62
      %p64 = scmp.eq.s32.totalorder %s17, 0
      %p65 = por %p63, %p64
      %s66 = ssub.s32 %s11, %s18
      %p67 = scmp.eq.s32.totalorder %s66, 0
      %s69 = sadd.s32 %s68, 1
      %s70 = scalar_select %p67, %s68, %s69
      %p73 = pneg %p67
      %p74 = scmp.eq.s32.totalorder %s11, 1
      %p75 = por %p73, %p74
      %p76 = scmp.ne.s32.totalorder %s68, %s71
      %p77 = scmp.eq.s32.totalorder %s11, 0
      %p78 = por %p76, %p77
      %p79 = scmp.ne.s32.totalorder %s68, %s71
      %p80 = scmp.eq.s32.totalorder %s16, 1
      %p81 = por %p79, %p80
      %p82 = scmp.ne.s32.totalorder %s71, %s72
      %p83 = scmp.eq.s32.totalorder %s16, 0
      %p84 = por %p82, %p83
      %p85 = scmp.ne.s32.totalorder %s71, %s72
      %p86 = scmp.eq.s32.totalorder %s17, 1
      %p87 = por %p85, %p86
      %p89 = scmp.ne.s32.totalorder %s72, %s88
      %p90 = scmp.eq.s32.totalorder %s17, 0
      %p91 = por %p89, %p90
      %p92 = scmp.le.s32.totalorder 1, %s11
      %p93 = scmp.lt.s32.totalorder %s11, 3
      %p94 = pnand %p92, %p93
      %p95 = pneg %p94
      // Predicated region
      $region9: #{tpu_custom_call.1} parent=5 // pred_check
        _
      $region10: #{tpu_custom_call.1} parent=5 // pred_check_branch
        %97 = sbr.rel (%p94) target = $region12
      $region11: #{tpu_custom_call.1} parent=5 // pred_region
        %s98 = ssub.s32 %s11, 1
        // Predicated region
        $region13: #{tpu_custom_call.1} parent=11 // pred_check
          %p99 = pneg %p58
        $region14: #{tpu_custom_call.1} parent=11 // pred_check_branch
          %101 = sbr.rel (%p99) target = $region16
        $region15: #{tpu_custom_call.1} parent=11 // pred_region
          _
        $region16: #{tpu_custom_call.1} parent=11 // pred_fallthru
          _
      $region12: #{tpu_custom_call.1} parent=5 // pred_fallthru
        _
      %p102 = scmp.lt.s32.totalorder %s11, 2
      // Predicated region
      $region17: #{tpu_custom_call.1} parent=5 // pred_check
        %p103 = pneg %p102
      $region18: #{tpu_custom_call.1} parent=5 // pred_check_branch
        %105 = sbr.rel (%p103) target = $region20
      $region19: #{tpu_custom_call.1} parent=5 // pred_region
        // Predicated region
        $region21: #{tpu_custom_call.1} parent=19 // pred_check
          %p106 = pneg %p31
        $region22: #{tpu_custom_call.1} parent=19 // pred_check_branch
          %108 = sbr.rel (%p106) target = $region24
        $region23: #{tpu_custom_call.1} parent=19 // pred_region
          %s109 = smul.u32 32, %s11
          %p110 = scmp.lt.s32.totalorder %s109, 63
          %s111 = scalar_select %p110, %s109, 63
          %s112 = smul.addr %s111, 8
          %s113 = scalar_lea.vmem %s0, %s112
          %s114 = smul.u32 32, %s11
        $region24: #{tpu_custom_call.1} parent=19 // pred_fallthru
          _
      $region20: #{tpu_custom_call.1} parent=5 // pred_fallthru
        _
      %p115 = scmp.le.s32.totalorder 1, %s11
      %p116 = scmp.lt.s32.totalorder %s11, 3
      %p117 = pnand %p115, %p116
      %p118 = pneg %p117
      // Predicated region
      $region25: #{tpu_custom_call.1} parent=5 // pred_check
        _
      $region26: #{tpu_custom_call.1} parent=5 // pred_check_branch
        %120 = sbr.rel (%p117) target = $region28
      $region27: #{tpu_custom_call.1} parent=5 // pred_region
        %s121 = ssub.s32 %s11, 1
        %s122 = smul.u32 32, %s16
        %p123 = scmp.lt.s32.totalorder %s122, 63
        %s124 = scalar_select %p123, %s122, 63
        %s125 = smul.addr %s124, 8
        %s126 = scalar_lea.vmem %s0, %s125
        %p127 = pneg %p37
        %p128 = pneg %p34
        %p129 = pneg %p58
        %p130 = pneg %p55
        %p131 = pneg %p84
        %p132 = pneg %p81
        %s133 = sand.u32 %s71, 1
        %s134 = scalar_lea.sflag [#allocation3], %s133
        %s135 = sand.u32 %s71, 1
        %s136 = smul.addr %s135, 2
        %s137 = scalar_lea.vmem [#allocation2], %s136
        %s138 = smul.u32 32, %s16
        %p139 = scmp.lt.s32.totalorder %s138, 63
        %s140 = scalar_select %p139, %s138, 63
        %s141 = smul.addr %s140, 8
        %s142 = scalar_lea.vmem %s0, %s141
        %s143 = smul.u32 32, %s16
        %s144 = smul.u32 2, %s16
        %v145 = vld [vmem:[%s142] sm:$0xff]
        %v146 = vld [vmem:[%s142 + $0x8] sm:$0xff]
        %v147 = vld [vmem:[%s142 + $0x10] sm:$0xff]
        %v148 = vld [vmem:[%s142 + $0x18] sm:$0xff]
        %v149 = vld [vmem:[%s142 + $0x20] sm:$0xff]
        %v150 = vld [vmem:[%s142 + $0x28] sm:$0xff]
        %v151 = vld [vmem:[%s142 + $0x30] sm:$0xff]
        %v152 = vld [vmem:[%s142 + $0x38] sm:$0xff]
        %v153 = vld [vmem:[%s142 + $0x40] sm:$0xff]
        %v154 = vld [vmem:[%s142 + $0x48] sm:$0xff]
        %v155 = vld [vmem:[%s142 + $0x50] sm:$0xff]
        %v156 = vld [vmem:[%s142 + $0x58] sm:$0xff]
        %v157 = vld [vmem:[%s142 + $0x60] sm:$0xff]
        %v158 = vld [vmem:[%s142 + $0x68] sm:$0xff]
        %v159 = vld [vmem:[%s142 + $0x70] sm:$0xff]
        %v160 = vld [vmem:[%s142 + $0x78] sm:$0xff]
        %v161 = vld [vmem:[%s142 + $0x80] sm:$0xff]
        %v162 = vld [vmem:[%s142 + $0x88] sm:$0xff]
        %v163 = vld [vmem:[%s142 + $0x90] sm:$0xff]
        %v164 = vld [vmem:[%s142 + $0x98] sm:$0xff]
        %v165 = vld [vmem:[%s142 + $0xa0] sm:$0xff]
        %v166 = vld [vmem:[%s142 + $0xa8] sm:$0xff]
        %v167 = vld [vmem:[%s142 + $0xb0] sm:$0xff]
        %v168 = vld [vmem:[%s142 + $0xb8] sm:$0xff]
        %v169 = vld [vmem:[%s142 + $0xc0] sm:$0xff]
        %v170 = vld [vmem:[%s142 + $0xc8] sm:$0xff]
        %v171 = vld [vmem:[%s142 + $0xd0] sm:$0xff]
        %v172 = vld [vmem:[%s142 + $0xd8] sm:$0xff]
        %v173 = vld [vmem:[%s142 + $0xe0] sm:$0xff]
        %v174 = vld [vmem:[%s142 + $0xe8] sm:$0xff]
        %v175 = vld [vmem:[%s142 + $0xf0] sm:$0xff]
        %v176 = vld [vmem:[%s142 + $0xf8] sm:$0xff]
        %v177 = vld [vmem:[%s1] sm:$0xff]
        %v178 = vld [vmem:[%s1 + $0x8] sm:$0xff]
        %v179 = vld [vmem:[%s1 + $0x10] sm:$0xff]
        %v180 = vld [vmem:[%s1 + $0x18] sm:$0xff]
        %v181 = vld [vmem:[%s1 + $0x20] sm:$0x3]
        %v182 = vld [vmem:[%s1 + $0x28] sm:$0x1]
        %v183 = vlaneseq
        %v184 = vshrl.u32 %v183, 7
        %v185 = vsub.s32 0, %v184
        %v186 = vrot.slane %v182, %v185
        %vm187 = vcmask 277504
        %v189 = vsel %vm187, %v145, 0
        %v192 = vsel %vm187, %v146, 0
        %v195 = vsel %vm187, %v147, 0
        %v198 = vsel %vm187, %v148, 0
        %v201 = vsel %vm187, %v149, 0
        %v204 = vsel %vm187, %v150, 0
        %v207 = vsel %vm187, %v151, 0
        %v210 = vsel %vm187, %v152, 0
        %v213 = vsel %vm187, %v153, 0
        %v216 = vsel %vm187, %v154, 0
        %v219 = vsel %vm187, %v155, 0
        %v222 = vsel %vm187, %v156, 0
        %v225 = vsel %vm187, %v157, 0
        %v228 = vsel %vm187, %v158, 0
        %v231 = vsel %vm187, %v159, 0
        %v234 = vsel %vm187, %v160, 0
        %v237 = vsel %vm187, %v161, 0
        %v240 = vsel %vm187, %v162, 0
        %v243 = vsel %vm187, %v163, 0
        %v246 = vsel %vm187, %v164, 0
        %v249 = vsel %vm187, %v165, 0
        %v252 = vsel %vm187, %v166, 0
        %v255 = vsel %vm187, %v167, 0
        %v258 = vsel %vm187, %v168, 0
        %v261 = vsel %vm187, %v169, 0
        %v264 = vsel %vm187, %v170, 0
        %v267 = vsel %vm187, %v171, 0
        %v270 = vsel %vm187, %v172, 0
        %v273 = vsel %vm187, %v173, 0
        %v276 = vsel %vm187, %v174, 0
        %v279 = vsel %vm187, %v175, 0
        %v282 = vsel %vm187, %v176, 0
        %vm284 = vcmask 1041408
        %v286 = vsel %vm284, %v181, 0
        %288 = vmatprep.subr.mxu0 0.0
        %289 = vmatpush1.msra.mxu0 %v177
        %290 = vmatprep.subr.mxu0 0.0
        %291 = vmatpush1.msra.mxu0 %v178
        %292 = vmatprep.subr.mxu0 0.0
        %293 = vmatpush1.msra.mxu0 %v179
        %294 = vmatprep.subr.mxu0 0.0
        %295 = vmatpush1.msra.mxu0 %v180
        %296 = vmatprep.subr.mxu0 0.0
        %297 = vmatpush1.msra.mxu0 %v286
        %298 = vmatprep.subr.mxu0 0.0
        %299 = vmatpush1.msra.mxu0 0.0
        %300 = vmatprep.subr.mxu0 0.0
        %301 = vmatpush1.msra.mxu0 0.0
        %302 = vmatprep.subr.mxu0 0.0
        %303 = vmatpush1.msra.mxu0 0.0
        %304 = vmatprep.subr.mxu0 0.0
        %305 = vmatpush1.msra.mxu0 0.0
        %306 = vmatprep.subr.mxu0 0.0
        %307 = vmatpush1.msra.mxu0 0.0
        %308 = vmatprep.subr.mxu0 0.0
        %309 = vmatpush1.msra.mxu0 0.0
        %310 = vmatprep.subr.mxu0 0.0
        %311 = vmatpush1.msra.mxu0 0.0
        %312 = vmatprep.subr.mxu0 0.0
        %313 = vmatpush1.msra.mxu0 0.0
        %314 = vmatprep.subr.mxu0 0.0
        %315 = vmatpush1.msra.mxu0 0.0
        %316 = vmatprep.subr.mxu0 0.0
        %317 = vmatpush1.msra.mxu0 0.0
        %318 = vmatprep.subr.mxu0 0.0
        %319 = vmatpush1.msra.mxu0 0.0
        %320 = vmatprep.subr.mxu0 0.0
        %321 = vmatpush1.msra.mxu0 0.0
        %322 = vmatprep.subr.mxu0 0.0
        %323 = vmatpush1.msra.mxu0 0.0
        %324 = vmatprep.subr.mxu0 0.0
        %325 = vmatpush1.msra.mxu0 0.0
        %326 = vmatprep.subr.mxu0 0.0
        %327 = vmatpush1.msra.mxu0 0.0
        %328 = vmatprep.subr.mxu0 0.0
        %329 = vmatpush1.msra.mxu0 0.0
        %330 = vmatprep.subr.mxu0 0.0
        %331 = vmatpush1.msra.mxu0 0.0
        %332 = vmatprep.subr.mxu0 0.0
        %333 = vmatpush1.msra.mxu0 0.0
        %334 = vmatprep.subr.mxu0 0.0
        %335 = vmatpush1.msra.mxu0 0.0
        %336 = vmatprep.subr.mxu0 0.0
        %337 = vmatpush1.msra.mxu0 0.0
        %338 = vmatprep.subr.mxu0 0.0
        %339 = vmatpush1.msra.mxu0 0.0
        %340 = vmatprep.subr.mxu0 0.0
        %341 = vmatpush1.msra.mxu0 0.0
        %342 = vmatprep.subr.mxu0 0.0
        %343 = vmatpush1.msra.mxu0 0.0
        %344 = vmatprep.subr.mxu0 0.0
        %345 = vmatpush1.msra.mxu0 0.0
        %346 = vmatprep.subr.mxu0 0.0
        %347 = vmatpush1.msra.mxu0 0.0
        %348 = vmatprep.subr.mxu0 0.0
        %349 = vmatpush1.msra.mxu0 0.0
        %350 = vmatprep.subr.mxu0 0.0
        %351 = vmatpush1.msra.mxu0 0.0
        %352 = vmatprep.mubr.f32.mxu0 0.0
        %353 = vmatmul.mubr.f32.gmra.mrb[0].mxu0 %v189
        %v354 = vpop.f32.mrb[0].mxu0
        %v355 = vadd.f32 %v186, %v354
        %v356 = vpop.f32.mrb[0].mxu0
        %357 = vmatprep.mubr.f32.mxu0 0.0
        %358 = vmatmul.mubr.f32.gmra.mrb[0].mxu0 %v192
        %v359 = vpop.f32.mrb[0].mxu0
        %v360 = vadd.f32 %v186, %v359
        %v361 = vpop.f32.mrb[0].mxu0
        %362 = vmatprep.mubr.f32.mxu0 0.0
        %363 = vmatmul.mubr.f32.gmra.mrb[0].mxu0 %v195
        %v364 = vpop.f32.mrb[0].mxu0
        %v365 = vadd.f32 %v186, %v364
        %v366 = vpop.f32.mrb[0].mxu0
        %367 = vmatprep.mubr.f32.mxu0 0.0
        %368 = vmatmul.mubr.f32.gmra.mrb[0].mxu0 %v198
        %v369 = vpop.f32.mrb[0].mxu0
        %v370 = vadd.f32 %v186, %v369
        %v371 = vpop.f32.mrb[0].mxu0
        %372 = vmatprep.mubr.f32.mxu0 0.0
        %373 = vmatmul.mubr.f32.gmra.mrb[0].mxu0 %v201
        %v374 = vpop.f32.mrb[0].mxu0
        %v375 = vadd.f32 %v186, %v374
        %v376 = vpop.f32.mrb[0].mxu0
        %377 = vmatprep.mubr.f32.mxu0 0.0
        %378 = vmatmul.mubr.f32.gmra.mrb[0].mxu0 %v204
        %v379 = vpop.f32.mrb[0].mxu0
        %v380 = vadd.f32 %v186, %v379
        %v381 = vpop.f32.mrb[0].mxu0
        %382 = vmatprep.mubr.f32.mxu0 0.0
        %383 = vmatmul.mubr.f32.gmra.mrb[0].mxu0 %v207
        %v384 = vpop.f32.mrb[0].mxu0
        %v385 = vadd.f32 %v186, %v384
        %v386 = vpop.f32.mrb[0].mxu0
        %387 = vmatprep.mubr.f32.mxu0 0.0
        %388 = vmatmul.mubr.f32.gmra.mrb[0].mxu0 %v210
        %v389 = vpop.f32.mrb[0].mxu0
        %v390 = vadd.f32 %v186, %v389
        %v391 = vpop.f32.mrb[0].mxu0
        %392 = vmatprep.mubr.f32.mxu0 0.0
        %393 = vmatmul.mubr.f32.gmra.mrb[0].mxu0 %v213
        %v394 = vpop.f32.mrb[0].mxu0
        %v395 = vadd.f32 %v186, %v394
        %v396 = vpop.f32.mrb[0].mxu0
        %397 = vmatprep.mubr.f32.mxu0 0.0
        %398 = vmatmul.mubr.f32.gmra.mrb[0].mxu0 %v216
        %v399 = vpop.f32.mrb[0].mxu0
        %v400 = vadd.f32 %v186, %v399
        %v401 = vpop.f32.mrb[0].mxu0
        %402 = vmatprep.mubr.f32.mxu0 0.0
        %403 = vmatmul.mubr.f32.gmra.mrb[0].mxu0 %v219
        %v404 = vpop.f32.mrb[0].mxu0
        %v405 = vadd.f32 %v186, %v404
        %v406 = vpop.f32.mrb[0].mxu0
        %407 = vmatprep.mubr.f32.mxu0 0.0
        %408 = vmatmul.mubr.f32.gmra.mrb[0].mxu0 %v222
        %v409 = vpop.f32.mrb[0].mxu0
        %v410 = vadd.f32 %v186, %v409
        %v411 = vpop.f32.mrb[0].mxu0
        %412 = vmatprep.mubr.f32.mxu0 0.0
        %413 = vmatmul.mubr.f32.gmra.mrb[0].mxu0 %v225
        %v414 = vpop.f32.mrb[0].mxu0
        %v415 = vadd.f32 %v186, %v414
        %v416 = vpop.f32.mrb[0].mxu0
        %417 = vmatprep.mubr.f32.mxu0 0.0
        %418 = vmatmul.mubr.f32.gmra.mrb[0].mxu0 %v228
        %v419 = vpop.f32.mrb[0].mxu0
        %v420 = vadd.f32 %v186, %v419
        %v421 = vpop.f32.mrb[0].mxu0
        %422 = vmatprep.mubr.f32.mxu0 0.0
        %423 = vmatmul.mubr.f32.gmra.mrb[0].mxu0 %v231
        %v424 = vpop.f32.mrb[0].mxu0
        %v425 = vadd.f32 %v186, %v424
        %v426 = vpop.f32.mrb[0].mxu0
        %427 = vmatprep.mubr.f32.mxu0 0.0
        %428 = vmatmul.mubr.f32.gmra.mrb[0].mxu0 %v234
        %v429 = vpop.f32.mrb[0].mxu0
        %v430 = vadd.f32 %v186, %v429
        %v431 = vpop.f32.mrb[0].mxu0
        %432 = vmatprep.mubr.f32.mxu0 0.0
        %433 = vmatmul.mubr.f32.gmra.mrb[0].mxu0 %v237
        %v434 = vpop.f32.mrb[0].mxu0
        %v435 = vadd.f32 %v186, %v434
        %v436 = vpop.f32.mrb[0].mxu0
        %437 = vmatprep.mubr.f32.mxu0 0.0
        %438 = vmatmul.mubr.f32.gmra.mrb[0].mxu0 %v240
        %v439 = vpop.f32.mrb[0].mxu0
        %v440 = vadd.f32 %v186, %v439
        %v441 = vpop.f32.mrb[0].mxu0
        %442 = vmatprep.mubr.f32.mxu0 0.0
        %443 = vmatmul.mubr.f32.gmra.mrb[0].mxu0 %v243
        %v444 = vpop.f32.mrb[0].mxu0
        %v445 = vadd.f32 %v186, %v444
        %v446 = vpop.f32.mrb[0].mxu0
        %447 = vmatprep.mubr.f32.mxu0 0.0
        %448 = vmatmul.mubr.f32.gmra.mrb[0].mxu0 %v246
        %v449 = vpop.f32.mrb[0].mxu0
        %v450 = vadd.f32 %v186, %v449
        %v451 = vpop.f32.mrb[0].mxu0
        %452 = vmatprep.mubr.f32.mxu0 0.0
        %453 = vmatmul.mubr.f32.gmra.mrb[0].mxu0 %v249
        %v454 = vpop.f32.mrb[0].mxu0
        %v455 = vadd.f32 %v186, %v454
        %v456 = vpop.f32.mrb[0].mxu0
        %457 = vmatprep.mubr.f32.mxu0 0.0
        %458 = vmatmul.mubr.f32.gmra.mrb[0].mxu0 %v252
        %v459 = vpop.f32.mrb[0].mxu0
        %v460 = vadd.f32 %v186, %v459
        %v461 = vpop.f32.mrb[0].mxu0
        %462 = vmatprep.mubr.f32.mxu0 0.0
        %463 = vmatmul.mubr.f32.gmra.mrb[0].mxu0 %v255
        %v464 = vpop.f32.mrb[0].mxu0
        %v465 = vadd.f32 %v186, %v464
        %v466 = vpop.f32.mrb[0].mxu0
        %467 = vmatprep.mubr.f32.mxu0 0.0
        %468 = vmatmul.mubr.f32.gmra.mrb[0].mxu0 %v258
        %v469 = vpop.f32.mrb[0].mxu0
        %v470 = vadd.f32 %v186, %v469
        %v471 = vpop.f32.mrb[0].mxu0
        %472 = vmatprep.mubr.f32.mxu0 0.0
        %473 = vmatmul.mubr.f32.gmra.mrb[0].mxu0 %v261
        %v474 = vpop.f32.mrb[0].mxu0
        %v475 = vadd.f32 %v186, %v474
        %v476 = vpop.f32.mrb[0].mxu0
        %477 = vmatprep.mubr.f32.mxu0 0.0
        %478 = vmatmul.mubr.f32.gmra.mrb[0].mxu0 %v264
        %v479 = vpop.f32.mrb[0].mxu0
        %v480 = vadd.f32 %v186, %v479
        %v481 = vpop.f32.mrb[0].mxu0
        %482 = vmatprep.mubr.f32.mxu0 0.0
        %483 = vmatmul.mubr.f32.gmra.mrb[0].mxu0 %v267
        %v484 = vpop.f32.mrb[0].mxu0
        %v485 = vadd.f32 %v186, %v484
        %v486 = vpop.f32.mrb[0].mxu0
        %487 = vmatprep.mubr.f32.mxu0 0.0
        %488 = vmatmul.mubr.f32.gmra.mrb[0].mxu0 %v270
        %v489 = vpop.f32.mrb[0].mxu0
        %v490 = vadd.f32 %v186, %v489
        %v491 = vpop.f32.mrb[0].mxu0
        %492 = vmatprep.mubr.f32.mxu0 0.0
        %493 = vmatmul.mubr.f32.gmra.mrb[0].mxu0 %v273
        %v494 = vpop.f32.mrb[0].mxu0
        %v495 = vadd.f32 %v186, %v494
        %v496 = vpop.f32.mrb[0].mxu0
        %497 = vmatprep.mubr.f32.mxu0 0.0
        %498 = vmatmul.mubr.f32.gmra.mrb[0].mxu0 %v276
        %v499 = vpop.f32.mrb[0].mxu0
        %v500 = vadd.f32 %v186, %v499
        %v501 = vpop.f32.mrb[0].mxu0
        %502 = vmatprep.mubr.f32.mxu0 0.0
        %503 = vmatmul.mubr.f32.gmra.mrb[0].mxu0 %v279
        %v504 = vpop.f32.mrb[0].mxu0
        %v505 = vadd.f32 %v186, %v504
        %v506 = vpop.f32.mrb[0].mxu0
        %507 = vmatprep.mubr.f32.mxu0 0.0
        %508 = vmatmul.mubr.f32.gmra.mrb[0].mxu0 %v282
        %v509 = vpop.f32.mrb[0].mxu0
        %v510 = vadd.f32 %v186, %v509
        %v511 = vpop.f32.mrb[0].mxu0
        %512 = vdwg.mxu0
        %v513 = vmax.f32 %v355, 0.0
        %v514 = vmax.f32 %v360, 0.0
        %v515 = vmax.f32 %v365, 0.0
        %v516 = vmax.f32 %v370, 0.0
        %v517 = vmax.f32 %v375, 0.0
        %v518 = vmax.f32 %v380, 0.0
        %v519 = vmax.f32 %v385, 0.0
        %v520 = vmax.f32 %v390, 0.0
        %v521 = vmax.f32 %v395, 0.0
        %v522 = vmax.f32 %v400, 0.0
        %v523 = vmax.f32 %v405, 0.0
        %v524 = vmax.f32 %v410, 0.0
        %v525 = vmax.f32 %v415, 0.0
        %v526 = vmax.f32 %v420, 0.0
        %v527 = vmax.f32 %v425, 0.0
        %v528 = vmax.f32 %v430, 0.0
        %v529 = vmax.f32 %v435, 0.0
        %v530 = vmax.f32 %v440, 0.0
        %v531 = vmax.f32 %v445, 0.0
        %v532 = vmax.f32 %v450, 0.0
        %v533 = vmax.f32 %v455, 0.0
        %v534 = vmax.f32 %v460, 0.0
        %v535 = vmax.f32 %v465, 0.0
        %v536 = vmax.f32 %v470, 0.0
        %v537 = vmax.f32 %v475, 0.0
        %v538 = vmax.f32 %v480, 0.0
        %v539 = vmax.f32 %v485, 0.0
        %v540 = vmax.f32 %v490, 0.0
        %v541 = vmax.f32 %v495, 0.0
        %v542 = vmax.f32 %v500, 0.0
        %v543 = vmax.f32 %v505, 0.0
        %v544 = vmax.f32 %v510, 0.0
        %v545 = vld [vmem:[%s1 + $0x30] sm:$0xff]
        %v546 = vld [vmem:[%s1 + $0x38] sm:$0xff]
        %v547 = vld [vmem:[%s1 + $0x40] sm:$0xff]
        %v548 = vld [vmem:[%s1 + $0x48] sm:$0xff]
        %v549 = vld [vmem:[%s1 + $0x50] sm:$0x1]
        %v550 = vlaneseq
        %v551 = vshrl.u32 %v550, 7
        %v552 = vsub.s32 0, %v551
        %v553 = vrot.slane %v549, %v552
        %vm554 = vcmask 261120
        %v556 = vsel %vm554, %v513, 0
        %v559 = vsel %vm554, %v514, 0
        %v562 = vsel %vm554, %v515, 0
        %v565 = vsel %vm554, %v516, 0
        %v568 = vsel %vm554, %v517, 0
        %v571 = vsel %vm554, %v518, 0
        %v574 = vsel %vm554, %v519, 0
        %v577 = vsel %vm554, %v520, 0
        %v580 = vsel %vm554, %v521, 0
        %v583 = vsel %vm554, %v522, 0
        %v586 = vsel %vm554, %v523, 0
        %v589 = vsel %vm554, %v524, 0
        %v592 = vsel %vm554, %v525, 0
        %v595 = vsel %vm554, %v526, 0
        %v598 = vsel %vm554, %v527, 0
        %v601 = vsel %vm554, %v528, 0
        %v604 = vsel %vm554, %v529, 0
        %v607 = vsel %vm554, %v530, 0
        %v610 = vsel %vm554, %v531, 0
        %v613 = vsel %vm554, %v532, 0
        %v616 = vsel %vm554, %v533, 0
        %v619 = vsel %vm554, %v534, 0
        %v622 = vsel %vm554, %v535, 0
        %v625 = vsel %vm554, %v536, 0
        %v628 = vsel %vm554, %v537, 0
        %v631 = vsel %vm554, %v538, 0
        %v634 = vsel %vm554, %v539, 0
        %v637 = vsel %vm554, %v540, 0
        %v640 = vsel %vm554, %v541, 0
        %v643 = vsel %vm554, %v542, 0
        %v646 = vsel %vm554, %v543, 0
        %v649 = vsel %vm554, %v544, 0
        %651 = vmatprep.subr.mxu0 0.0
        %652 = vmatpush1.msra.mxu0 %v545
        %653 = vmatprep.subr.mxu0 0.0
        %654 = vmatpush1.msra.mxu0 %v546
        %655 = vmatprep.subr.mxu0 0.0
        %656 = vmatpush1.msra.mxu0 %v547
        %657 = vmatprep.subr.mxu0 0.0
        %658 = vmatpush1.msra.mxu0 %v548
        %659 = vmatprep.subr.mxu0 0.0
        %660 = vmatpush1.msra.mxu0 0.0
        %661 = vmatprep.subr.mxu0 0.0
        %662 = vmatpush1.msra.mxu0 0.0
        %663 = vmatprep.subr.mxu0 0.0
        %664 = vmatpush1.msra.mxu0 0.0
        %665 = vmatprep.subr.mxu0 0.0
        %666 = vmatpush1.msra.mxu0 0.0
        %667 = vmatprep.subr.mxu0 0.0
        %668 = vmatpush1.msra.mxu0 0.0
        %669 = vmatprep.subr.mxu0 0.0
        %670 = vmatpush1.msra.mxu0 0.0
        %671 = vmatprep.subr.mxu0 0.0
        %672 = vmatpush1.msra.mxu0 0.0
        %673 = vmatprep.subr.mxu0 0.0
        %674 = vmatpush1.msra.mxu0 0.0
        %675 = vmatprep.subr.mxu0 0.0
        %676 = vmatpush1.msra.mxu0 0.0
        %677 = vmatprep.subr.mxu0 0.0
        %678 = vmatpush1.msra.mxu0 0.0
        %679 = vmatprep.subr.mxu0 0.0
        %680 = vmatpush1.msra.mxu0 0.0
        %681 = vmatprep.subr.mxu0 0.0
        %682 = vmatpush1.msra.mxu0 0.0
        %683 = vmatprep.subr.mxu0 0.0
        %684 = vmatpush1.msra.mxu0 0.0
        %685 = vmatprep.subr.mxu0 0.0
        %686 = vmatpush1.msra.mxu0 0.0
        %687 = vmatprep.subr.mxu0 0.0
        %688 = vmatpush1.msra.mxu0 0.0
        %689 = vmatprep.subr.mxu0 0.0
        %690 = vmatpush1.msra.mxu0 0.0
        %691 = vmatprep.subr.mxu0 0.0
        %692 = vmatpush1.msra.mxu0 0.0
        %693 = vmatprep.subr.mxu0 0.0
        %694 = vmatpush1.msra.mxu0 0.0
        %695 = vmatprep.subr.mxu0 0.0
        %696 = vmatpush1.msra.mxu0 0.0
        %697 = vmatprep.subr.mxu0 0.0
        %698 = vmatpush1.msra.mxu0 0.0
        %699 = vmatprep.subr.mxu0 0.0
        %700 = vmatpush1.msra.mxu0 0.0
        %701 = vmatprep.subr.mxu0 0.0
        %702 = vmatpush1.msra.mxu0 0.0
        %703 = vmatprep.subr.mxu0 0.0
        %704 = vmatpush1.msra.mxu0 0.0
        %705 = vmatprep.subr.mxu0 0.0
        %706 = vmatpush1.msra.mxu0 0.0
        %707 = vmatprep.subr.mxu0 0.0
        %708 = vmatpush1.msra.mxu0 0.0
        %709 = vmatprep.subr.mxu0 0.0
        %710 = vmatpush1.msra.mxu0 0.0
        %711 = vmatprep.subr.mxu0 0.0
        %712 = vmatpush1.msra.mxu0 0.0
        %713 = vmatprep.subr.mxu0 0.0
        %714 = vmatpush1.msra.mxu0 0.0
        %715 = vmatprep.mubr.f32.mxu0 0.0
        %716 = vmatmul.mubr.f32.gmra.mrb[0].mxu0 %v556
        %v717 = vpop.f32.mrb[0].mxu0
        %v718 = vadd.f32 %v553, %v717
        %v719 = vpop.f32.mrb[0].mxu0
        %720 = vmatprep.mubr.f32.mxu0 0.0
        %721 = vmatmul.mubr.f32.gmra.mrb[0].mxu0 %v559
        %v722 = vpop.f32.mrb[0].mxu0
        %v723 = vadd.f32 %v553, %v722
        %v724 = vpop.f32.mrb[0].mxu0
        %725 = vmatprep.mubr.f32.mxu0 0.0
        %726 = vmatmul.mubr.f32.gmra.mrb[0].mxu0 %v562
        %v727 = vpop.f32.mrb[0].mxu0
        %v728 = vadd.f32 %v553, %v727
        %v729 = vpop.f32.mrb[0].mxu0
        %730 = vmatprep.mubr.f32.mxu0 0.0
        %731 = vmatmul.mubr.f32.gmra.mrb[0].mxu0 %v565
        %v732 = vpop.f32.mrb[0].mxu0
        %v733 = vadd.f32 %v553, %v732
        %v734 = vpop.f32.mrb[0].mxu0
        %735 = vmatprep.mubr.f32.mxu0 0.0
        %736 = vmatmul.mubr.f32.gmra.mrb[0].mxu0 %v568
        %v737 = vpop.f32.mrb[0].mxu0
        %v738 = vadd.f32 %v553, %v737
        %v739 = vpop.f32.mrb[0].mxu0
        %740 = vmatprep.mubr.f32.mxu0 0.0
        %741 = vmatmul.mubr.f32.gmra.mrb[0].mxu0 %v571
        %v742 = vpop.f32.mrb[0].mxu0
        %v743 = vadd.f32 %v553, %v742
        %v744 = vpop.f32.mrb[0].mxu0
        %745 = vmatprep.mubr.f32.mxu0 0.0
        %746 = vmatmul.mubr.f32.gmra.mrb[0].mxu0 %v574
        %v747 = vpop.f32.mrb[0].mxu0
        %v748 = vadd.f32 %v553, %v747
        %v749 = vpop.f32.mrb[0].mxu0
        %750 = vmatprep.mubr.f32.mxu0 0.0
        %751 = vmatmul.mubr.f32.gmra.mrb[0].mxu0 %v577
        %v752 = vpop.f32.mrb[0].mxu0
        %v753 = vadd.f32 %v553, %v752
        %v754 = vpop.f32.mrb[0].mxu0
        %755 = vmatprep.mubr.f32.mxu0 0.0
        %756 = vmatmul.mubr.f32.gmra.mrb[0].mxu0 %v580
        %v757 = vpop.f32.mrb[0].mxu0
        %v758 = vadd.f32 %v553, %v757
        %v759 = vpop.f32.mrb[0].mxu0
        %760 = vmatprep.mubr.f32.mxu0 0.0
        %761 = vmatmul.mubr.f32.gmra.mrb[0].mxu0 %v583
        %v762 = vpop.f32.mrb[0].mxu0
        %v763 = vadd.f32 %v553, %v762
        %v764 = vpop.f32.mrb[0].mxu0
        %765 = vmatprep.mubr.f32.mxu0 0.0
        %766 = vmatmul.mubr.f32.gmra.mrb[0].mxu0 %v586
        %v767 = vpop.f32.mrb[0].mxu0
        %v768 = vadd.f32 %v553, %v767
        %v769 = vpop.f32.mrb[0].mxu0
        %770 = vmatprep.mubr.f32.mxu0 0.0
        %771 = vmatmul.mubr.f32.gmra.mrb[0].mxu0 %v589
        %v772 = vpop.f32.mrb[0].mxu0
        %v773 = vadd.f32 %v553, %v772
        %v774 = vpop.f32.mrb[0].mxu0
        %775 = vmatprep.mubr.f32.mxu0 0.0
        %776 = vmatmul.mubr.f32.gmra.mrb[0].mxu0 %v592
        %v777 = vpop.f32.mrb[0].mxu0
        %v778 = vadd.f32 %v553, %v777
        %v779 = vpop.f32.mrb[0].mxu0
        %780 = vmatprep.mubr.f32.mxu0 0.0
        %781 = vmatmul.mubr.f32.gmra.mrb[0].mxu0 %v595
        %v782 = vpop.f32.mrb[0].mxu0
        %v783 = vadd.f32 %v553, %v782
        %v784 = vpop.f32.mrb[0].mxu0
        %785 = vmatprep.mubr.f32.mxu0 0.0
        %786 = vmatmul.mubr.f32.gmra.mrb[0].mxu0 %v598
        %v787 = vpop.f32.mrb[0].mxu0
        %v788 = vadd.f32 %v553, %v787
        %v789 = vpop.f32.mrb[0].mxu0
        %790 = vmatprep.mubr.f32.mxu0 0.0
        %791 = vmatmul.mubr.f32.gmra.mrb[0].mxu0 %v601
        %v792 = vpop.f32.mrb[0].mxu0
        %v793 = vadd.f32 %v553, %v792
        %v794 = vpop.f32.mrb[0].mxu0
        %795 = vmatprep.mubr.f32.mxu0 0.0
        %796 = vmatmul.mubr.f32.gmra.mrb[0].mxu0 %v604
        %v797 = vpop.f32.mrb[0].mxu0
        %v798 = vadd.f32 %v553, %v797
        %v799 = vpop.f32.mrb[0].mxu0
        %800 = vmatprep.mubr.f32.mxu0 0.0
        %801 = vmatmul.mubr.f32.gmra.mrb[0].mxu0 %v607
        %v802 = vpop.f32.mrb[0].mxu0
        %v803 = vadd.f32 %v553, %v802
        %v804 = vpop.f32.mrb[0].mxu0
        %805 = vmatprep.mubr.f32.mxu0 0.0
        %806 = vmatmul.mubr.f32.gmra.mrb[0].mxu0 %v610
        %v807 = vpop.f32.mrb[0].mxu0
        %v808 = vadd.f32 %v553, %v807
        %v809 = vpop.f32.mrb[0].mxu0
        %810 = vmatprep.mubr.f32.mxu0 0.0
        %811 = vmatmul.mubr.f32.gmra.mrb[0].mxu0 %v613
        %v812 = vpop.f32.mrb[0].mxu0
        %v813 = vadd.f32 %v553, %v812
        %v814 = vpop.f32.mrb[0].mxu0
        %815 = vmatprep.mubr.f32.mxu0 0.0
        %816 = vmatmul.mubr.f32.gmra.mrb[0].mxu0 %v616
        %v817 = vpop.f32.mrb[0].mxu0
        %v818 = vadd.f32 %v553, %v817
        %v819 = vpop.f32.mrb[0].mxu0
        %820 = vmatprep.mubr.f32.mxu0 0.0
        %821 = vmatmul.mubr.f32.gmra.mrb[0].mxu0 %v619
        %v822 = vpop.f32.mrb[0].mxu0
        %v823 = vadd.f32 %v553, %v822
        %v824 = vpop.f32.mrb[0].mxu0
        %825 = vmatprep.mubr.f32.mxu0 0.0
        %826 = vmatmul.mubr.f32.gmra.mrb[0].mxu0 %v622
        %v827 = vpop.f32.mrb[0].mxu0
        %v828 = vadd.f32 %v553, %v827
        %v829 = vpop.f32.mrb[0].mxu0
        %830 = vmatprep.mubr.f32.mxu0 0.0
        %831 = vmatmul.mubr.f32.gmra.mrb[0].mxu0 %v625
        %v832 = vpop.f32.mrb[0].mxu0
        %v833 = vadd.f32 %v553, %v832
        %v834 = vpop.f32.mrb[0].mxu0
        %835 = vmatprep.mubr.f32.mxu0 0.0
        %836 = vmatmul.mubr.f32.gmra.mrb[0].mxu0 %v628
        %v837 = vpop.f32.mrb[0].mxu0
        %v838 = vadd.f32 %v553, %v837
        %v839 = vpop.f32.mrb[0].mxu0
        %840 = vmatprep.mubr.f32.mxu0 0.0
        %841 = vmatmul.mubr.f32.gmra.mrb[0].mxu0 %v631
        %v842 = vpop.f32.mrb[0].mxu0
        %v843 = vadd.f32 %v553, %v842
        %v844 = vpop.f32.mrb[0].mxu0
        %845 = vmatprep.mubr.f32.mxu0 0.0
        %846 = vmatmul.mubr.f32.gmra.mrb[0].mxu0 %v634
        %v847 = vpop.f32.mrb[0].mxu0
        %v848 = vadd.f32 %v553, %v847
        %v849 = vpop.f32.mrb[0].mxu0
        %850 = vmatprep.mubr.f32.mxu0 0.0
        %851 = vmatmul.mubr.f32.gmra.mrb[0].mxu0 %v637
        %v852 = vpop.f32.mrb[0].mxu0
        %v853 = vadd.f32 %v553, %v852
        %v854 = vpop.f32.mrb[0].mxu0
        %855 = vmatprep.mubr.f32.mxu0 0.0
        %856 = vmatmul.mubr.f32.gmra.mrb[0].mxu0 %v640
        %v857 = vpop.f32.mrb[0].mxu0
        %v858 = vadd.f32 %v553, %v857
        %v859 = vpop.f32.mrb[0].mxu0
        %860 = vmatprep.mubr.f32.mxu0 0.0
        %861 = vmatmul.mubr.f32.gmra.mrb[0].mxu0 %v643
        %v862 = vpop.f32.mrb[0].mxu0
        %v863 = vadd.f32 %v553, %v862
        %v864 = vpop.f32.mrb[0].mxu0
        %865 = vmatprep.mubr.f32.mxu0 0.0
        %866 = vmatmul.mubr.f32.gmra.mrb[0].mxu0 %v646
        %v867 = vpop.f32.mrb[0].mxu0
        %v868 = vadd.f32 %v553, %v867
        %v869 = vpop.f32.mrb[0].mxu0
        %870 = vmatprep.mubr.f32.mxu0 0.0
        %871 = vmatmul.mubr.f32.gmra.mrb[0].mxu0 %v649
        %v872 = vpop.f32.mrb[0].mxu0
        %v873 = vadd.f32 %v553, %v872
        %v874 = vpop.f32.mrb[0].mxu0
        %875 = vdwg.mxu0
        %v876 = vld [vmem:[%s1 + $0x58] sm:$0x1]
        %v877 = vld [vmem:[%s1 + $0x60] sm:$0x1]
        %v878 = vrcp.pop %v718
        %v879 = vrcp.pop %v723
        %v880 = vrcp.pop %v728
        %v881 = vrcp.pop %v733
        %v882 = vrcp.pop %v738
        %v883 = vrcp.pop %v743
        %v884 = vrcp.pop %v748
        %v885 = vrcp.pop %v753
        %v886 = vrcp.pop %v758
        %v887 = vrcp.pop %v763
        %v888 = vrcp.pop %v768
        %v889 = vrcp.pop %v773
        %v890 = vrcp.pop %v778
        %v891 = vrcp.pop %v783
        %v892 = vrcp.pop %v788
        %v893 = vrcp.pop %v793
        %v894 = vrcp.pop %v798
        %v895 = vrcp.pop %v803
        %v896 = vrcp.pop %v808
        %v897 = vrcp.pop %v813
        %v898 = vrcp.pop %v818
        %v899 = vrcp.pop %v823
        %v900 = vrcp.pop %v828
        %v901 = vrcp.pop %v833
        %v902 = vrcp.pop %v838
        %v903 = vrcp.pop %v843
        %v904 = vrcp.pop %v848
        %v905 = vrcp.pop %v853
        %v906 = vrcp.pop %v858
        %v907 = vrcp.pop %v863
        %v908 = vrcp.pop %v868
        %v909 = vrcp.pop %v873
        %942 = vrot.lane.b32.xlu0 %v878, 24
        %v943 = vpop.permute.xlu0 %942
        %944 = vrot.lane.b32.xlu0 %v879, 24
        %v945 = vpop.permute.xlu0 %944
        %946 = vrot.lane.b32.xlu0 %v880, 24
        %v947 = vpop.permute.xlu0 %946
        %948 = vrot.lane.b32.xlu0 %v881, 24
        %v949 = vpop.permute.xlu0 %948
        %950 = vrot.lane.b32.xlu0 %v882, 24
        %v951 = vpop.permute.xlu0 %950
        %952 = vrot.lane.b32.xlu0 %v883, 24
        %v953 = vpop.permute.xlu0 %952
        %954 = vrot.lane.b32.xlu0 %v884, 24
        %v955 = vpop.permute.xlu0 %954
        %956 = vrot.lane.b32.xlu0 %v885, 24
        %v957 = vpop.permute.xlu0 %956
        %958 = vrot.lane.b32.xlu0 %v886, 24
        %v959 = vpop.permute.xlu0 %958
        %960 = vrot.lane.b32.xlu0 %v887, 24
        %v961 = vpop.permute.xlu0 %960
        %962 = vrot.lane.b32.xlu0 %v888, 24
        %v963 = vpop.permute.xlu0 %962
        %964 = vrot.lane.b32.xlu0 %v889, 24
        %v965 = vpop.permute.xlu0 %964
        %966 = vrot.lane.b32.xlu0 %v890, 24
        %v967 = vpop.permute.xlu0 %966
        %968 = vrot.lane.b32.xlu0 %v891, 24
        %v969 = vpop.permute.xlu0 %968
        %970 = vrot.lane.b32.xlu0 %v892, 24
        %v971 = vpop.permute.xlu0 %970
        %972 = vrot.lane.b32.xlu0 %v893, 24
        %v973 = vpop.permute.xlu0 %972
        %974 = vrot.lane.b32.xlu0 %v894, 24
        %v975 = vpop.permute.xlu0 %974
        %976 = vrot.lane.b32.xlu0 %v895, 24
        %v977 = vpop.permute.xlu0 %976
        %978 = vrot.lane.b32.xlu0 %v896, 24
        %v979 = vpop.permute.xlu0 %978
        %980 = vrot.lane.b32.xlu0 %v897, 24
        %v981 = vpop.permute.xlu0 %980
        %982 = vrot.lane.b32.xlu0 %v898, 24
        %v983 = vpop.permute.xlu0 %982
        %984 = vrot.lane.b32.xlu0 %v899, 24
        %v985 = vpop.permute.xlu0 %984
        %986 = vrot.lane.b32.xlu0 %v900, 24
        %v987 = vpop.permute.xlu0 %986
        %988 = vrot.lane.b32.xlu0 %v901, 24
        %v989 = vpop.permute.xlu0 %988
        %990 = vrot.lane.b32.xlu0 %v902, 24
        %v991 = vpop.permute.xlu0 %990
        %992 = vrot.lane.b32.xlu0 %v903, 24
        %v993 = vpop.permute.xlu0 %992
        %994 = vrot.lane.b32.xlu0 %v904, 24
        %v995 = vpop.permute.xlu0 %994
        %996 = vrot.lane.b32.xlu0 %v905, 24
        %v997 = vpop.permute.xlu0 %996
        %998 = vrot.lane.b32.xlu0 %v906, 24
        %v999 = vpop.permute.xlu0 %998
        %1000 = vrot.lane.b32.xlu0 %v907, 24
        %v1001 = vpop.permute.xlu0 %1000
        %1002 = vrot.lane.b32.xlu0 %v908, 24
        %v1003 = vpop.permute.xlu0 %1002
        %1004 = vrot.lane.b32.xlu0 %v909, 24
        %v1005 = vpop.permute.xlu0 %1004
        %v1038 = vmul.f32 %v145, %v943
        %v1039 = vmul.f32 %v146, %v945
        %v1040 = vmul.f32 %v147, %v947
        %v1041 = vmul.f32 %v148, %v949
        %v1042 = vmul.f32 %v149, %v951
        %v1043 = vmul.f32 %v150, %v953
        %v1044 = vmul.f32 %v151, %v955
        %v1045 = vmul.f32 %v152, %v957
        %v1046 = vmul.f32 %v153, %v959
        %v1047 = vmul.f32 %v154, %v961
        %v1048 = vmul.f32 %v155, %v963
        %v1049 = vmul.f32 %v156, %v965
        %v1050 = vmul.f32 %v157, %v967
        %v1051 = vmul.f32 %v158, %v969
        %v1052 = vmul.f32 %v159, %v971
        %v1053 = vmul.f32 %v160, %v973
        %v1054 = vmul.f32 %v161, %v975
        %v1055 = vmul.f32 %v162, %v977
        %v1056 = vmul.f32 %v163, %v979
        %v1057 = vmul.f32 %v164, %v981
        %v1058 = vmul.f32 %v165, %v983
        %v1059 = vmul.f32 %v166, %v985
        %v1060 = vmul.f32 %v167, %v987
        %v1061 = vmul.f32 %v168, %v989
        %v1062 = vmul.f32 %v169, %v991
        %v1063 = vmul.f32 %v170, %v993
        %v1064 = vmul.f32 %v171, %v995
        %v1065 = vmul.f32 %v172, %v997
        %v1066 = vmul.f32 %v173, %v999
        %v1067 = vmul.f32 %v174, %v1001
        %v1068 = vmul.f32 %v175, %v1003
        %v1069 = vmul.f32 %v176, %v1005
        %1102 = vrot.lane.b32.xlu0 %v718, 32
        %v1103 = vpop.permute.xlu0 %1102
        %1104 = vrot.lane.b32.xlu0 %v723, 32
        %v1105 = vpop.permute.xlu0 %1104
        %1106 = vrot.lane.b32.xlu0 %v728, 32
        %v1107 = vpop.permute.xlu0 %1106
        %1108 = vrot.lane.b32.xlu0 %v733, 32
        %v1109 = vpop.permute.xlu0 %1108
        %1110 = vrot.lane.b32.xlu0 %v738, 32
        %v1111 = vpop.permute.xlu0 %1110
        %1112 = vrot.lane.b32.xlu0 %v743, 32
        %v1113 = vpop.permute.xlu0 %1112
        %1114 = vrot.lane.b32.xlu0 %v748, 32
        %v1115 = vpop.permute.xlu0 %1114
        %1116 = vrot.lane.b32.xlu0 %v753, 32
        %v1117 = vpop.permute.xlu0 %1116
        %1118 = vrot.lane.b32.xlu0 %v758, 32
        %v1119 = vpop.permute.xlu0 %1118
        %1120 = vrot.lane.b32.xlu0 %v763, 32
        %v1121 = vpop.permute.xlu0 %1120
        %1122 = vrot.lane.b32.xlu0 %v768, 32
        %v1123 = vpop.permute.xlu0 %1122
        %1124 = vrot.lane.b32.xlu0 %v773, 32
        %v1125 = vpop.permute.xlu0 %1124
        %1126 = vrot.lane.b32.xlu0 %v778, 32
        %v1127 = vpop.permute.xlu0 %1126
        %1128 = vrot.lane.b32.xlu0 %v783, 32
        %v1129 = vpop.permute.xlu0 %1128
        %1130 = vrot.lane.b32.xlu0 %v788, 32
        %v1131 = vpop.permute.xlu0 %1130
        %1132 = vrot.lane.b32.xlu0 %v793, 32
        %v1133 = vpop.permute.xlu0 %1132
        %1134 = vrot.lane.b32.xlu0 %v798, 32
        %v1135 = vpop.permute.xlu0 %1134
        %1136 = vrot.lane.b32.xlu0 %v803, 32
        %v1137 = vpop.permute.xlu0 %1136
        %1138 = vrot.lane.b32.xlu0 %v808, 32
        %v1139 = vpop.permute.xlu0 %1138
        %1140 = vrot.lane.b32.xlu0 %v813, 32
        %v1141 = vpop.permute.xlu0 %1140
        %1142 = vrot.lane.b32.xlu0 %v818, 32
        %v1143 = vpop.permute.xlu0 %1142
        %1144 = vrot.lane.b32.xlu0 %v823, 32
        %v1145 = vpop.permute.xlu0 %1144
        %1146 = vrot.lane.b32.xlu0 %v828, 32
        %v1147 = vpop.permute.xlu0 %1146
        %1148 = vrot.lane.b32.xlu0 %v833, 32
        %v1149 = vpop.permute.xlu0 %1148
        %1150 = vrot.lane.b32.xlu0 %v838, 32
        %v1151 = vpop.permute.xlu0 %1150
        %1152 = vrot.lane.b32.xlu0 %v843, 32
        %v1153 = vpop.permute.xlu0 %1152
        %1154 = vrot.lane.b32.xlu0 %v848, 32
        %v1155 = vpop.permute.xlu0 %1154
        %1156 = vrot.lane.b32.xlu0 %v853, 32
        %v1157 = vpop.permute.xlu0 %1156
        %1158 = vrot.lane.b32.xlu0 %v858, 32
        %v1159 = vpop.permute.xlu0 %1158
        %1160 = vrot.lane.b32.xlu0 %v863, 32
        %v1161 = vpop.permute.xlu0 %1160
        %1162 = vrot.lane.b32.xlu0 %v868, 32
        %v1163 = vpop.permute.xlu0 %1162
        %1164 = vrot.lane.b32.xlu0 %v873, 32
        %v1165 = vpop.permute.xlu0 %1164
        %v1198 = vadd.f32 %v355, %v1103
        %v1199 = vadd.f32 %v360, %v1105
        %v1200 = vadd.f32 %v365, %v1107
        %v1201 = vadd.f32 %v370, %v1109
        %v1202 = vadd.f32 %v375, %v1111
        %v1203 = vadd.f32 %v380, %v1113
        %v1204 = vadd.f32 %v385, %v1115
        %v1205 = vadd.f32 %v390, %v1117
        %v1206 = vadd.f32 %v395, %v1119
        %v1207 = vadd.f32 %v400, %v1121
        %v1208 = vadd.f32 %v405, %v1123
        %v1209 = vadd.f32 %v410, %v1125
        %v1210 = vadd.f32 %v415, %v1127
        %v1211 = vadd.f32 %v420, %v1129
        %v1212 = vadd.f32 %v425, %v1131
        %v1213 = vadd.f32 %v430, %v1133
        %v1214 = vadd.f32 %v435, %v1135
        %v1215 = vadd.f32 %v440, %v1137
        %v1216 = vadd.f32 %v445, %v1139
        %v1217 = vadd.f32 %v450, %v1141
        %v1218 = vadd.f32 %v455, %v1143
        %v1219 = vadd.f32 %v460, %v1145
        %v1220 = vadd.f32 %v465, %v1147
        %v1221 = vadd.f32 %v470, %v1149
        %v1222 = vadd.f32 %v475, %v1151
        %v1223 = vadd.f32 %v480, %v1153
        %v1224 = vadd.f32 %v485, %v1155
        %v1225 = vadd.f32 %v490, %v1157
        %v1226 = vadd.f32 %v495, %v1159
        %v1227 = vadd.f32 %v500, %v1161
        %v1228 = vadd.f32 %v505, %v1163
        %v1229 = vadd.f32 %v510, %v1165
        %1231 = vset.pattern.permute.xlu0 0
        %1232 = vperm.xlu0 %1231, %v1038
        %v1233 = vpop.permute.xlu0 %1232
        %1236 = vset.pattern.permute.xlu0 0
        %1237 = vperm.xlu0 %1236, %v1039
        %v1238 = vpop.permute.xlu0 %1237
        %1241 = vset.pattern.permute.xlu0 0
        %1242 = vperm.xlu0 %1241, %v1040
        %v1243 = vpop.permute.xlu0 %1242
        %1246 = vset.pattern.permute.xlu0 0
        %1247 = vperm.xlu0 %1246, %v1041
        %v1248 = vpop.permute.xlu0 %1247
        %1251 = vset.pattern.permute.xlu0 0
        %1252 = vperm.xlu0 %1251, %v1042
        %v1253 = vpop.permute.xlu0 %1252
        %1256 = vset.pattern.permute.xlu0 0
        %1257 = vperm.xlu0 %1256, %v1043
        %v1258 = vpop.permute.xlu0 %1257
        %1261 = vset.pattern.permute.xlu0 0
        %1262 = vperm.xlu0 %1261, %v1044
        %v1263 = vpop.permute.xlu0 %1262
        %1266 = vset.pattern.permute.xlu0 0
        %1267 = vperm.xlu0 %1266, %v1045
        %v1268 = vpop.permute.xlu0 %1267
        %1271 = vset.pattern.permute.xlu0 0
        %1272 = vperm.xlu0 %1271, %v1046
        %v1273 = vpop.permute.xlu0 %1272
        %1276 = vset.pattern.permute.xlu0 0
        %1277 = vperm.xlu0 %1276, %v1047
        %v1278 = vpop.permute.xlu0 %1277
        %1281 = vset.pattern.permute.xlu0 0
        %1282 = vperm.xlu0 %1281, %v1048
        %v1283 = vpop.permute.xlu0 %1282
        %1286 = vset.pattern.permute.xlu0 0
        %1287 = vperm.xlu0 %1286, %v1049
        %v1288 = vpop.permute.xlu0 %1287
        %1291 = vset.pattern.permute.xlu0 0
        %1292 = vperm.xlu0 %1291, %v1050
        %v1293 = vpop.permute.xlu0 %1292
        %1296 = vset.pattern.permute.xlu0 0
        %1297 = vperm.xlu0 %1296, %v1051
        %v1298 = vpop.permute.xlu0 %1297
        %1301 = vset.pattern.permute.xlu0 0
        %1302 = vperm.xlu0 %1301, %v1052
        %v1303 = vpop.permute.xlu0 %1302
        %1306 = vset.pattern.permute.xlu0 0
        %1307 = vperm.xlu0 %1306, %v1053
        %v1308 = vpop.permute.xlu0 %1307
        %1311 = vset.pattern.permute.xlu0 0
        %1312 = vperm.xlu0 %1311, %v1054
        %v1313 = vpop.permute.xlu0 %1312
        %1316 = vset.pattern.permute.xlu0 0
        %1317 = vperm.xlu0 %1316, %v1055
        %v1318 = vpop.permute.xlu0 %1317
        %1321 = vset.pattern.permute.xlu0 0
        %1322 = vperm.xlu0 %1321, %v1056
        %v1323 = vpop.permute.xlu0 %1322
        %1326 = vset.pattern.permute.xlu0 0
        %1327 = vperm.xlu0 %1326, %v1057
        %v1328 = vpop.permute.xlu0 %1327
        %1331 = vset.pattern.permute.xlu0 0
        %1332 = vperm.xlu0 %1331, %v1058
        %v1333 = vpop.permute.xlu0 %1332
        %1336 = vset.pattern.permute.xlu0 0
        %1337 = vperm.xlu0 %1336, %v1059
        %v1338 = vpop.permute.xlu0 %1337
        %1341 = vset.pattern.permute.xlu0 0
        %1342 = vperm.xlu0 %1341, %v1060
        %v1343 = vpop.permute.xlu0 %1342
        %1346 = vset.pattern.permute.xlu0 0
        %1347 = vperm.xlu0 %1346, %v1061
        %v1348 = vpop.permute.xlu0 %1347
        %1351 = vset.pattern.permute.xlu0 0
        %1352 = vperm.xlu0 %1351, %v1062
        %v1353 = vpop.permute.xlu0 %1352
        %1356 = vset.pattern.permute.xlu0 0
        %1357 = vperm.xlu0 %1356, %v1063
        %v1358 = vpop.permute.xlu0 %1357
        %1361 = vset.pattern.permute.xlu0 0
        %1362 = vperm.xlu0 %1361, %v1064
        %v1363 = vpop.permute.xlu0 %1362
        %1366 = vset.pattern.permute.xlu0 0
        %1367 = vperm.xlu0 %1366, %v1065
        %v1368 = vpop.permute.xlu0 %1367
        %1371 = vset.pattern.permute.xlu0 0
        %1372 = vperm.xlu0 %1371, %v1066
        %v1373 = vpop.permute.xlu0 %1372
        %1376 = vset.pattern.permute.xlu0 0
        %1377 = vperm.xlu0 %1376, %v1067
        %v1378 = vpop.permute.xlu0 %1377
        %1381 = vset.pattern.permute.xlu0 0
        %1382 = vperm.xlu0 %1381, %v1068
        %v1383 = vpop.permute.xlu0 %1382
        %1386 = vset.pattern.permute.xlu0 0
        %1387 = vperm.xlu0 %1386, %v1069
        %v1388 = vpop.permute.xlu0 %1387
        %v1390 = vlaneseq
        %v1391 = vshrl.u32 %v1390, 7
        %v1392 = vsub.s32 0, %v1391
        %v1393 = vrot.slane %v876, %v1392
        %v1394 = vmul.f32 %v1233, %v1393
        %v1395 = vmul.f32 %v1238, %v1393
        %v1396 = vmul.f32 %v1243, %v1393
        %v1397 = vmul.f32 %v1248, %v1393
        %v1398 = vmul.f32 %v1253, %v1393
        %v1399 = vmul.f32 %v1258, %v1393
        %v1400 = vmul.f32 %v1263, %v1393
        %v1401 = vmul.f32 %v1268, %v1393
        %v1402 = vmul.f32 %v1273, %v1393
        %v1403 = vmul.f32 %v1278, %v1393
        %v1404 = vmul.f32 %v1283, %v1393
        %v1405 = vmul.f32 %v1288, %v1393
        %v1406 = vmul.f32 %v1293, %v1393
        %v1407 = vmul.f32 %v1298, %v1393
        %v1408 = vmul.f32 %v1303, %v1393
        %v1409 = vmul.f32 %v1308, %v1393
        %v1410 = vmul.f32 %v1313, %v1393
        %v1411 = vmul.f32 %v1318, %v1393
        %v1412 = vmul.f32 %v1323, %v1393
        %v1413 = vmul.f32 %v1328, %v1393
        %v1414 = vmul.f32 %v1333, %v1393
        %v1415 = vmul.f32 %v1338, %v1393
        %v1416 = vmul.f32 %v1343, %v1393
        %v1417 = vmul.f32 %v1348, %v1393
        %v1418 = vmul.f32 %v1353, %v1393
        %v1419 = vmul.f32 %v1358, %v1393
        %v1420 = vmul.f32 %v1363, %v1393
        %v1421 = vmul.f32 %v1368, %v1393
        %v1422 = vmul.f32 %v1373, %v1393
        %v1423 = vmul.f32 %v1378, %v1393
        %v1424 = vmul.f32 %v1383, %v1393
        %v1425 = vmul.f32 %v1388, %v1393
        %1458 = vrot.lane.b32.xlu0 %v1394, 32
        %v1459 = vpop.permute.xlu0 %1458
        %1460 = vrot.lane.b32.xlu0 %v1395, 32
        %v1461 = vpop.permute.xlu0 %1460
        %1462 = vrot.lane.b32.xlu0 %v1396, 32
        %v1463 = vpop.permute.xlu0 %1462
        %1464 = vrot.lane.b32.xlu0 %v1397, 32
        %v1465 = vpop.permute.xlu0 %1464
        %1466 = vrot.lane.b32.xlu0 %v1398, 32
        %v1467 = vpop.permute.xlu0 %1466
        %1468 = vrot.lane.b32.xlu0 %v1399, 32
        %v1469 = vpop.permute.xlu0 %1468
        %1470 = vrot.lane.b32.xlu0 %v1400, 32
        %v1471 = vpop.permute.xlu0 %1470
        %1472 = vrot.lane.b32.xlu0 %v1401, 32
        %v1473 = vpop.permute.xlu0 %1472
        %1474 = vrot.lane.b32.xlu0 %v1402, 32
        %v1475 = vpop.permute.xlu0 %1474
        %1476 = vrot.lane.b32.xlu0 %v1403, 32
        %v1477 = vpop.permute.xlu0 %1476
        %1478 = vrot.lane.b32.xlu0 %v1404, 32
        %v1479 = vpop.permute.xlu0 %1478
        %1480 = vrot.lane.b32.xlu0 %v1405, 32
        %v1481 = vpop.permute.xlu0 %1480
        %1482 = vrot.lane.b32.xlu0 %v1406, 32
        %v1483 = vpop.permute.xlu0 %1482
        %1484 = vrot.lane.b32.xlu0 %v1407, 32
        %v1485 = vpop.permute.xlu0 %1484
        %1486 = vrot.lane.b32.xlu0 %v1408, 32
        %v1487 = vpop.permute.xlu0 %1486
        %1488 = vrot.lane.b32.xlu0 %v1409, 32
        %v1489 = vpop.permute.xlu0 %1488
        %1490 = vrot.lane.b32.xlu0 %v1410, 32
        %v1491 = vpop.permute.xlu0 %1490
        %1492 = vrot.lane.b32.xlu0 %v1411, 32
        %v1493 = vpop.permute.xlu0 %1492
        %1494 = vrot.lane.b32.xlu0 %v1412, 32
        %v1495 = vpop.permute.xlu0 %1494
        %1496 = vrot.lane.b32.xlu0 %v1413, 32
        %v1497 = vpop.permute.xlu0 %1496
        %1498 = vrot.lane.b32.xlu0 %v1414, 32
        %v1499 = vpop.permute.xlu0 %1498
        %1500 = vrot.lane.b32.xlu0 %v1415, 32
        %v1501 = vpop.permute.xlu0 %1500
        %1502 = vrot.lane.b32.xlu0 %v1416, 32
        %v1503 = vpop.permute.xlu0 %1502
        %1504 = vrot.lane.b32.xlu0 %v1417, 32
        %v1505 = vpop.permute.xlu0 %1504
        %1506 = vrot.lane.b32.xlu0 %v1418, 32
        %v1507 = vpop.permute.xlu0 %1506
        %1508 = vrot.lane.b32.xlu0 %v1419, 32
        %v1509 = vpop.permute.xlu0 %1508
        %1510 = vrot.lane.b32.xlu0 %v1420, 32
        %v1511 = vpop.permute.xlu0 %1510
        %1512 = vrot.lane.b32.xlu0 %v1421, 32
        %v1513 = vpop.permute.xlu0 %1512
        %1514 = vrot.lane.b32.xlu0 %v1422, 32
        %v1515 = vpop.permute.xlu0 %1514
        %1516 = vrot.lane.b32.xlu0 %v1423, 32
        %v1517 = vpop.permute.xlu0 %1516
        %1518 = vrot.lane.b32.xlu0 %v1424, 32
        %v1519 = vpop.permute.xlu0 %1518
        %1520 = vrot.lane.b32.xlu0 %v1425, 32
        %v1521 = vpop.permute.xlu0 %1520
        %v1554 = vadd.f32 %v1198, %v1459
        %v1555 = vadd.f32 %v1199, %v1461
        %v1556 = vadd.f32 %v1200, %v1463
        %v1557 = vadd.f32 %v1201, %v1465
        %v1558 = vadd.f32 %v1202, %v1467
        %v1559 = vadd.f32 %v1203, %v1469
        %v1560 = vadd.f32 %v1204, %v1471
        %v1561 = vadd.f32 %v1205, %v1473
        %v1562 = vadd.f32 %v1206, %v1475
        %v1563 = vadd.f32 %v1207, %v1477
        %v1564 = vadd.f32 %v1208, %v1479
        %v1565 = vadd.f32 %v1209, %v1481
        %v1566 = vadd.f32 %v1210, %v1483
        %v1567 = vadd.f32 %v1211, %v1485
        %v1568 = vadd.f32 %v1212, %v1487
        %v1569 = vadd.f32 %v1213, %v1489
        %v1570 = vadd.f32 %v1214, %v1491
        %v1571 = vadd.f32 %v1215, %v1493
        %v1572 = vadd.f32 %v1216, %v1495
        %v1573 = vadd.f32 %v1217, %v1497
        %v1574 = vadd.f32 %v1218, %v1499
        %v1575 = vadd.f32 %v1219, %v1501
        %v1576 = vadd.f32 %v1220, %v1503
        %v1577 = vadd.f32 %v1221, %v1505
        %v1578 = vadd.f32 %v1222, %v1507
        %v1579 = vadd.f32 %v1223, %v1509
        %v1580 = vadd.f32 %v1224, %v1511
        %v1581 = vadd.f32 %v1225, %v1513
        %v1582 = vadd.f32 %v1226, %v1515
        %v1583 = vadd.f32 %v1227, %v1517
        %v1584 = vadd.f32 %v1228, %v1519
        %v1585 = vadd.f32 %v1229, %v1521
        %v1586 = vmax.f32 %v1554, 0.0
        %v1587 = vmax.f32 %v1555, 0.0
        %v1588 = vmax.f32 %v1556, 0.0
        %v1589 = vmax.f32 %v1557, 0.0
        %v1590 = vmax.f32 %v1558, 0.0
        %v1591 = vmax.f32 %v1559, 0.0
        %v1592 = vmax.f32 %v1560, 0.0
        %v1593 = vmax.f32 %v1561, 0.0
        %v1594 = vmax.f32 %v1562, 0.0
        %v1595 = vmax.f32 %v1563, 0.0
        %v1596 = vmax.f32 %v1564, 0.0
        %v1597 = vmax.f32 %v1565, 0.0
        %v1598 = vmax.f32 %v1566, 0.0
        %v1599 = vmax.f32 %v1567, 0.0
        %v1600 = vmax.f32 %v1568, 0.0
        %v1601 = vmax.f32 %v1569, 0.0
        %v1602 = vmax.f32 %v1570, 0.0
        %v1603 = vmax.f32 %v1571, 0.0
        %v1604 = vmax.f32 %v1572, 0.0
        %v1605 = vmax.f32 %v1573, 0.0
        %v1606 = vmax.f32 %v1574, 0.0
        %v1607 = vmax.f32 %v1575, 0.0
        %v1608 = vmax.f32 %v1576, 0.0
        %v1609 = vmax.f32 %v1577, 0.0
        %v1610 = vmax.f32 %v1578, 0.0
        %v1611 = vmax.f32 %v1579, 0.0
        %v1612 = vmax.f32 %v1580, 0.0
        %v1613 = vmax.f32 %v1581, 0.0
        %v1614 = vmax.f32 %v1582, 0.0
        %v1615 = vmax.f32 %v1583, 0.0
        %v1616 = vmax.f32 %v1584, 0.0
        %v1617 = vmax.f32 %v1585, 0.0
        %v1618 = vld [vmem:[%s1 + $0x68] sm:$0x1]
        %v1619 = vlaneseq
        %v1620 = vshrl.u32 %v1619, 7
        %v1621 = vsub.s32 0, %v1620
        %v1622 = vrot.slane %v1618, %v1621
        %1624 = vrot.lane.b32.xlu0 %v1622, 64
        %v1625 = vpop.permute.xlu0 %1624
        %v1627 = vmul.f32 %v1586, %v1625
        %v1628 = vmul.f32 %v1587, %v1625
        %v1629 = vmul.f32 %v1588, %v1625
        %v1630 = vmul.f32 %v1589, %v1625
        %v1631 = vmul.f32 %v1590, %v1625
        %v1632 = vmul.f32 %v1591, %v1625
        %v1633 = vmul.f32 %v1592, %v1625
        %v1634 = vmul.f32 %v1593, %v1625
        %v1635 = vmul.f32 %v1594, %v1625
        %v1636 = vmul.f32 %v1595, %v1625
        %v1637 = vmul.f32 %v1596, %v1625
        %v1638 = vmul.f32 %v1597, %v1625
        %v1639 = vmul.f32 %v1598, %v1625
        %v1640 = vmul.f32 %v1599, %v1625
        %v1641 = vmul.f32 %v1600, %v1625
        %v1642 = vmul.f32 %v1601, %v1625
        %v1643 = vmul.f32 %v1602, %v1625
        %v1644 = vmul.f32 %v1603, %v1625
        %v1645 = vmul.f32 %v1604, %v1625
        %v1646 = vmul.f32 %v1605, %v1625
        %v1647 = vmul.f32 %v1606, %v1625
        %v1648 = vmul.f32 %v1607, %v1625
        %v1649 = vmul.f32 %v1608, %v1625
        %v1650 = vmul.f32 %v1609, %v1625
        %v1651 = vmul.f32 %v1610, %v1625
        %v1652 = vmul.f32 %v1611, %v1625
        %v1653 = vmul.f32 %v1612, %v1625
        %v1654 = vmul.f32 %v1613, %v1625
        %v1655 = vmul.f32 %v1614, %v1625
        %v1656 = vmul.f32 %v1615, %v1625
        %v1657 = vmul.f32 %v1616, %v1625
        %v1658 = vmul.f32 %v1617, %v1625
        %1691 = vrot.lane.b32.xlu0 %v1627, 64
        %v1692 = vpop.permute.xlu0 %1691
        %1693 = vrot.lane.b32.xlu0 %v1628, 64
        %v1694 = vpop.permute.xlu0 %1693
        %1695 = vrot.lane.b32.xlu0 %v1629, 64
        %v1696 = vpop.permute.xlu0 %1695
        %1697 = vrot.lane.b32.xlu0 %v1630, 64
        %v1698 = vpop.permute.xlu0 %1697
        %1699 = vrot.lane.b32.xlu0 %v1631, 64
        %v1700 = vpop.permute.xlu0 %1699
        %1701 = vrot.lane.b32.xlu0 %v1632, 64
        %v1702 = vpop.permute.xlu0 %1701
        %1703 = vrot.lane.b32.xlu0 %v1633, 64
        %v1704 = vpop.permute.xlu0 %1703
        %1705 = vrot.lane.b32.xlu0 %v1634, 64
        %v1706 = vpop.permute.xlu0 %1705
        %1707 = vrot.lane.b32.xlu0 %v1635, 64
        %v1708 = vpop.permute.xlu0 %1707
        %1709 = vrot.lane.b32.xlu0 %v1636, 64
        %v1710 = vpop.permute.xlu0 %1709
        %1711 = vrot.lane.b32.xlu0 %v1637, 64
        %v1712 = vpop.permute.xlu0 %1711
        %1713 = vrot.lane.b32.xlu0 %v1638, 64
        %v1714 = vpop.permute.xlu0 %1713
        %1715 = vrot.lane.b32.xlu0 %v1639, 64
        %v1716 = vpop.permute.xlu0 %1715
        %1717 = vrot.lane.b32.xlu0 %v1640, 64
        %v1718 = vpop.permute.xlu0 %1717
        %1719 = vrot.lane.b32.xlu0 %v1641, 64
        %v1720 = vpop.permute.xlu0 %1719
        %1721 = vrot.lane.b32.xlu0 %v1642, 64
        %v1722 = vpop.permute.xlu0 %1721
        %1723 = vrot.lane.b32.xlu0 %v1643, 64
        %v1724 = vpop.permute.xlu0 %1723
        %1725 = vrot.lane.b32.xlu0 %v1644, 64
        %v1726 = vpop.permute.xlu0 %1725
        %1727 = vrot.lane.b32.xlu0 %v1645, 64
        %v1728 = vpop.permute.xlu0 %1727
        %1729 = vrot.lane.b32.xlu0 %v1646, 64
        %v1730 = vpop.permute.xlu0 %1729
        %1731 = vrot.lane.b32.xlu0 %v1647, 64
        %v1732 = vpop.permute.xlu0 %1731
        %1733 = vrot.lane.b32.xlu0 %v1648, 64
        %v1734 = vpop.permute.xlu0 %1733
        %1735 = vrot.lane.b32.xlu0 %v1649, 64
        %v1736 = vpop.permute.xlu0 %1735
        %1737 = vrot.lane.b32.xlu0 %v1650, 64
        %v1738 = vpop.permute.xlu0 %1737
        %1739 = vrot.lane.b32.xlu0 %v1651, 64
        %v1740 = vpop.permute.xlu0 %1739
        %1741 = vrot.lane.b32.xlu0 %v1652, 64
        %v1742 = vpop.permute.xlu0 %1741
        %1743 = vrot.lane.b32.xlu0 %v1653, 64
        %v1744 = vpop.permute.xlu0 %1743
        %1745 = vrot.lane.b32.xlu0 %v1654, 64
        %v1746 = vpop.permute.xlu0 %1745
        %1747 = vrot.lane.b32.xlu0 %v1655, 64
        %v1748 = vpop.permute.xlu0 %1747
        %1749 = vrot.lane.b32.xlu0 %v1656, 64
        %v1750 = vpop.permute.xlu0 %1749
        %1751 = vrot.lane.b32.xlu0 %v1657, 64
        %v1752 = vpop.permute.xlu0 %1751
        %1753 = vrot.lane.b32.xlu0 %v1658, 64
        %v1754 = vpop.permute.xlu0 %1753
        %v1787 = vsel %vm554, %v1692, 0.0
        %1788 = vadd.xlane.f32.xlu0 %v1787
        %v1789 = vpop.xlane.xlu0 %1788
        %v1790 = vsel %vm554, %v1694, 0.0
        %1791 = vadd.xlane.f32.xlu0 %v1790
        %v1792 = vpop.xlane.xlu0 %1791
        %v1793 = vsel %vm554, %v1696, 0.0
        %1794 = vadd.xlane.f32.xlu0 %v1793
        %v1795 = vpop.xlane.xlu0 %1794
        %v1796 = vsel %vm554, %v1698, 0.0
        %1797 = vadd.xlane.f32.xlu0 %v1796
        %v1798 = vpop.xlane.xlu0 %1797
        %v1799 = vsel %vm554, %v1700, 0.0
        %1800 = vadd.xlane.f32.xlu0 %v1799
        %v1801 = vpop.xlane.xlu0 %1800
        %v1802 = vsel %vm554, %v1702, 0.0
        %1803 = vadd.xlane.f32.xlu0 %v1802
        %v1804 = vpop.xlane.xlu0 %1803
        %v1805 = vsel %vm554, %v1704, 0.0
        %1806 = vadd.xlane.f32.xlu0 %v1805
        %v1807 = vpop.xlane.xlu0 %1806
        %v1808 = vsel %vm554, %v1706, 0.0
        %1809 = vadd.xlane.f32.xlu0 %v1808
        %v1810 = vpop.xlane.xlu0 %1809
        %v1811 = vsel %vm554, %v1708, 0.0
        %1812 = vadd.xlane.f32.xlu0 %v1811
        %v1813 = vpop.xlane.xlu0 %1812
        %v1814 = vsel %vm554, %v1710, 0.0
        %1815 = vadd.xlane.f32.xlu0 %v1814
        %v1816 = vpop.xlane.xlu0 %1815
        %v1817 = vsel %vm554, %v1712, 0.0
        %1818 = vadd.xlane.f32.xlu0 %v1817
        %v1819 = vpop.xlane.xlu0 %1818
        %v1820 = vsel %vm554, %v1714, 0.0
        %1821 = vadd.xlane.f32.xlu0 %v1820
        %v1822 = vpop.xlane.xlu0 %1821
        %v1823 = vsel %vm554, %v1716, 0.0
        %1824 = vadd.xlane.f32.xlu0 %v1823
        %v1825 = vpop.xlane.xlu0 %1824
        %v1826 = vsel %vm554, %v1718, 0.0
        %1827 = vadd.xlane.f32.xlu0 %v1826
        %v1828 = vpop.xlane.xlu0 %1827
        %v1829 = vsel %vm554, %v1720, 0.0
        %1830 = vadd.xlane.f32.xlu0 %v1829
        %v1831 = vpop.xlane.xlu0 %1830
        %v1832 = vsel %vm554, %v1722, 0.0
        %1833 = vadd.xlane.f32.xlu0 %v1832
        %v1834 = vpop.xlane.xlu0 %1833
        %v1835 = vsel %vm554, %v1724, 0.0
        %1836 = vadd.xlane.f32.xlu0 %v1835
        %v1837 = vpop.xlane.xlu0 %1836
        %v1838 = vsel %vm554, %v1726, 0.0
        %1839 = vadd.xlane.f32.xlu0 %v1838
        %v1840 = vpop.xlane.xlu0 %1839
        %v1841 = vsel %vm554, %v1728, 0.0
        %1842 = vadd.xlane.f32.xlu0 %v1841
        %v1843 = vpop.xlane.xlu0 %1842
        %v1844 = vsel %vm554, %v1730, 0.0
        %1845 = vadd.xlane.f32.xlu0 %v1844
        %v1846 = vpop.xlane.xlu0 %1845
        %v1847 = vsel %vm554, %v1732, 0.0
        %1848 = vadd.xlane.f32.xlu0 %v1847
        %v1849 = vpop.xlane.xlu0 %1848
        %v1850 = vsel %vm554, %v1734, 0.0
        %1851 = vadd.xlane.f32.xlu0 %v1850
        %v1852 = vpop.xlane.xlu0 %1851
        %v1853 = vsel %vm554, %v1736, 0.0
        %1854 = vadd.xlane.f32.xlu0 %v1853
        %v1855 = vpop.xlane.xlu0 %1854
        %v1856 = vsel %vm554, %v1738, 0.0
        %1857 = vadd.xlane.f32.xlu0 %v1856
        %v1858 = vpop.xlane.xlu0 %1857
        %v1859 = vsel %vm554, %v1740, 0.0
        %1860 = vadd.xlane.f32.xlu0 %v1859
        %v1861 = vpop.xlane.xlu0 %1860
        %v1862 = vsel %vm554, %v1742, 0.0
        %1863 = vadd.xlane.f32.xlu0 %v1862
        %v1864 = vpop.xlane.xlu0 %1863
        %v1865 = vsel %vm554, %v1744, 0.0
        %1866 = vadd.xlane.f32.xlu0 %v1865
        %v1867 = vpop.xlane.xlu0 %1866
        %v1868 = vsel %vm554, %v1746, 0.0
        %1869 = vadd.xlane.f32.xlu0 %v1868
        %v1870 = vpop.xlane.xlu0 %1869
        %v1871 = vsel %vm554, %v1748, 0.0
        %1872 = vadd.xlane.f32.xlu0 %v1871
        %v1873 = vpop.xlane.xlu0 %1872
        %v1874 = vsel %vm554, %v1750, 0.0
        %1875 = vadd.xlane.f32.xlu0 %v1874
        %v1876 = vpop.xlane.xlu0 %1875
        %v1877 = vsel %vm554, %v1752, 0.0
        %1878 = vadd.xlane.f32.xlu0 %v1877
        %v1879 = vpop.xlane.xlu0 %1878
        %v1880 = vsel %vm554, %v1754, 0.0
        %1881 = vadd.xlane.f32.xlu0 %v1880
        %v1882 = vpop.xlane.xlu0 %1881
        %v1883 = vadd.f32 %v1789, %v1622
        %v1884 = vadd.f32 %v1792, %v1622
        %v1885 = vadd.f32 %v1795, %v1622
        %v1886 = vadd.f32 %v1798, %v1622
        %v1887 = vadd.f32 %v1801, %v1622
        %v1888 = vadd.f32 %v1804, %v1622
        %v1889 = vadd.f32 %v1807, %v1622
        %v1890 = vadd.f32 %v1810, %v1622
        %v1891 = vadd.f32 %v1813, %v1622
        %v1892 = vadd.f32 %v1816, %v1622
        %v1893 = vadd.f32 %v1819, %v1622
        %v1894 = vadd.f32 %v1822, %v1622
        %v1895 = vadd.f32 %v1825, %v1622
        %v1896 = vadd.f32 %v1828, %v1622
        %v1897 = vadd.f32 %v1831, %v1622
        %v1898 = vadd.f32 %v1834, %v1622
        %v1899 = vadd.f32 %v1837, %v1622
        %v1900 = vadd.f32 %v1840, %v1622
        %v1901 = vadd.f32 %v1843, %v1622
        %v1902 = vadd.f32 %v1846, %v1622
        %v1903 = vadd.f32 %v1849, %v1622
        %v1904 = vadd.f32 %v1852, %v1622
        %v1905 = vadd.f32 %v1855, %v1622
        %v1906 = vadd.f32 %v1858, %v1622
        %v1907 = vadd.f32 %v1861, %v1622
        %v1908 = vadd.f32 %v1864, %v1622
        %v1909 = vadd.f32 %v1867, %v1622
        %v1910 = vadd.f32 %v1870, %v1622
        %v1911 = vadd.f32 %v1873, %v1622
        %v1912 = vadd.f32 %v1876, %v1622
        %v1913 = vadd.f32 %v1879, %v1622
        %v1914 = vadd.f32 %v1882, %v1622
        %v1915 = vrcp.pop %v1883
        %v1916 = vrcp.pop %v1884
        %v1917 = vrcp.pop %v1885
        %v1918 = vrcp.pop %v1886
        %v1919 = vrcp.pop %v1887
        %v1920 = vrcp.pop %v1888
        %v1921 = vrcp.pop %v1889
        %v1922 = vrcp.pop %v1890
        %v1923 = vrcp.pop %v1891
        %v1924 = vrcp.pop %v1892
        %v1925 = vrcp.pop %v1893
        %v1926 = vrcp.pop %v1894
        %v1927 = vrcp.pop %v1895
        %v1928 = vrcp.pop %v1896
        %v1929 = vrcp.pop %v1897
        %v1930 = vrcp.pop %v1898
        %v1931 = vrcp.pop %v1899
        %v1932 = vrcp.pop %v1900
        %v1933 = vrcp.pop %v1901
        %v1934 = vrcp.pop %v1902
        %v1935 = vrcp.pop %v1903
        %v1936 = vrcp.pop %v1904
        %v1937 = vrcp.pop %v1905
        %v1938 = vrcp.pop %v1906
        %v1939 = vrcp.pop %v1907
        %v1940 = vrcp.pop %v1908
        %v1941 = vrcp.pop %v1909
        %v1942 = vrcp.pop %v1910
        %v1943 = vrcp.pop %v1911
        %v1944 = vrcp.pop %v1912
        %v1945 = vrcp.pop %v1913
        %v1946 = vrcp.pop %v1914
        %1979 = vrot.lane.b32.xlu0 %v1915, 97
        %v1980 = vpop.permute.xlu0 %1979
        %1981 = vrot.lane.b32.xlu0 %v1916, 97
        %v1982 = vpop.permute.xlu0 %1981
        %1983 = vrot.lane.b32.xlu0 %v1917, 97
        %v1984 = vpop.permute.xlu0 %1983
        %1985 = vrot.lane.b32.xlu0 %v1918, 97
        %v1986 = vpop.permute.xlu0 %1985
        %1987 = vrot.lane.b32.xlu0 %v1919, 97
        %v1988 = vpop.permute.xlu0 %1987
        %1989 = vrot.lane.b32.xlu0 %v1920, 97
        %v1990 = vpop.permute.xlu0 %1989
        %1991 = vrot.lane.b32.xlu0 %v1921, 97
        %v1992 = vpop.permute.xlu0 %1991
        %1993 = vrot.lane.b32.xlu0 %v1922, 97
        %v1994 = vpop.permute.xlu0 %1993
        %1995 = vrot.lane.b32.xlu0 %v1923, 97
        %v1996 = vpop.permute.xlu0 %1995
        %1997 = vrot.lane.b32.xlu0 %v1924, 97
        %v1998 = vpop.permute.xlu0 %1997
        %1999 = vrot.lane.b32.xlu0 %v1925, 97
        %v2000 = vpop.permute.xlu0 %1999
        %2001 = vrot.lane.b32.xlu0 %v1926, 97
        %v2002 = vpop.permute.xlu0 %2001
        %2003 = vrot.lane.b32.xlu0 %v1927, 97
        %v2004 = vpop.permute.xlu0 %2003
        %2005 = vrot.lane.b32.xlu0 %v1928, 97
        %v2006 = vpop.permute.xlu0 %2005
        %2007 = vrot.lane.b32.xlu0 %v1929, 97
        %v2008 = vpop.permute.xlu0 %2007
        %2009 = vrot.lane.b32.xlu0 %v1930, 97
        %v2010 = vpop.permute.xlu0 %2009
        %2011 = vrot.lane.b32.xlu0 %v1931, 97
        %v2012 = vpop.permute.xlu0 %2011
        %2013 = vrot.lane.b32.xlu0 %v1932, 97
        %v2014 = vpop.permute.xlu0 %2013
        %2015 = vrot.lane.b32.xlu0 %v1933, 97
        %v2016 = vpop.permute.xlu0 %2015
        %2017 = vrot.lane.b32.xlu0 %v1934, 97
        %v2018 = vpop.permute.xlu0 %2017
        %2019 = vrot.lane.b32.xlu0 %v1935, 97
        %v2020 = vpop.permute.xlu0 %2019
        %2021 = vrot.lane.b32.xlu0 %v1936, 97
        %v2022 = vpop.permute.xlu0 %2021
        %2023 = vrot.lane.b32.xlu0 %v1937, 97
        %v2024 = vpop.permute.xlu0 %2023
        %2025 = vrot.lane.b32.xlu0 %v1938, 97
        %v2026 = vpop.permute.xlu0 %2025
        %2027 = vrot.lane.b32.xlu0 %v1939, 97
        %v2028 = vpop.permute.xlu0 %2027
        %2029 = vrot.lane.b32.xlu0 %v1940, 97
        %v2030 = vpop.permute.xlu0 %2029
        %2031 = vrot.lane.b32.xlu0 %v1941, 97
        %v2032 = vpop.permute.xlu0 %2031
        %2033 = vrot.lane.b32.xlu0 %v1942, 97
        %v2034 = vpop.permute.xlu0 %2033
        %2035 = vrot.lane.b32.xlu0 %v1943, 97
        %v2036 = vpop.permute.xlu0 %2035
        %2037 = vrot.lane.b32.xlu0 %v1944, 97
        %v2038 = vpop.permute.xlu0 %2037
        %2039 = vrot.lane.b32.xlu0 %v1945, 97
        %v2040 = vpop.permute.xlu0 %2039
        %2041 = vrot.lane.b32.xlu0 %v1946, 97
        %v2042 = vpop.permute.xlu0 %2041
        %v2075 = vmul.f32 %v145, %v1980
        %v2076 = vmul.f32 %v146, %v1982
        %v2077 = vmul.f32 %v147, %v1984
        %v2078 = vmul.f32 %v148, %v1986
        %v2079 = vmul.f32 %v149, %v1988
        %v2080 = vmul.f32 %v150, %v1990
        %v2081 = vmul.f32 %v151, %v1992
        %v2082 = vmul.f32 %v152, %v1994
        %v2083 = vmul.f32 %v153, %v1996
        %v2084 = vmul.f32 %v154, %v1998
        %v2085 = vmul.f32 %v155, %v2000
        %v2086 = vmul.f32 %v156, %v2002
        %v2087 = vmul.f32 %v157, %v2004
        %v2088 = vmul.f32 %v158, %v2006
        %v2089 = vmul.f32 %v159, %v2008
        %v2090 = vmul.f32 %v160, %v2010
        %v2091 = vmul.f32 %v161, %v2012
        %v2092 = vmul.f32 %v162, %v2014
        %v2093 = vmul.f32 %v163, %v2016
        %v2094 = vmul.f32 %v164, %v2018
        %v2095 = vmul.f32 %v165, %v2020
        %v2096 = vmul.f32 %v166, %v2022
        %v2097 = vmul.f32 %v167, %v2024
        %v2098 = vmul.f32 %v168, %v2026
        %v2099 = vmul.f32 %v169, %v2028
        %v2100 = vmul.f32 %v170, %v2030
        %v2101 = vmul.f32 %v171, %v2032
        %v2102 = vmul.f32 %v172, %v2034
        %v2103 = vmul.f32 %v173, %v2036
        %v2104 = vmul.f32 %v174, %v2038
        %v2105 = vmul.f32 %v175, %v2040
        %v2106 = vmul.f32 %v176, %v2042
        %2108 = vset.pattern.permute.xlu0 1
        %2109 = vperm.xlu0 %2108, %v2075
        %v2110 = vpop.permute.xlu0 %2109
        %2113 = vset.pattern.permute.xlu0 1
        %2114 = vperm.xlu0 %2113, %v2076
        %v2115 = vpop.permute.xlu0 %2114
        %2118 = vset.pattern.permute.xlu0 1
        %2119 = vperm.xlu0 %2118, %v2077
        %v2120 = vpop.permute.xlu0 %2119
        %2123 = vset.pattern.permute.xlu0 1
        %2124 = vperm.xlu0 %2123, %v2078
        %v2125 = vpop.permute.xlu0 %2124
        %2128 = vset.pattern.permute.xlu0 1
        %2129 = vperm.xlu0 %2128, %v2079
        %v2130 = vpop.permute.xlu0 %2129
        %2133 = vset.pattern.permute.xlu0 1
        %2134 = vperm.xlu0 %2133, %v2080
        %v2135 = vpop.permute.xlu0 %2134
        %2138 = vset.pattern.permute.xlu0 1
        %2139 = vperm.xlu0 %2138, %v2081
        %v2140 = vpop.permute.xlu0 %2139
        %2143 = vset.pattern.permute.xlu0 1
        %2144 = vperm.xlu0 %2143, %v2082
        %v2145 = vpop.permute.xlu0 %2144
        %2148 = vset.pattern.permute.xlu0 1
        %2149 = vperm.xlu0 %2148, %v2083
        %v2150 = vpop.permute.xlu0 %2149
        %2153 = vset.pattern.permute.xlu0 1
        %2154 = vperm.xlu0 %2153, %v2084
        %v2155 = vpop.permute.xlu0 %2154
        %2158 = vset.pattern.permute.xlu0 1
        %2159 = vperm.xlu0 %2158, %v2085
        %v2160 = vpop.permute.xlu0 %2159
        %2163 = vset.pattern.permute.xlu0 1
        %2164 = vperm.xlu0 %2163, %v2086
        %v2165 = vpop.permute.xlu0 %2164
        %2168 = vset.pattern.permute.xlu0 1
        %2169 = vperm.xlu0 %2168, %v2087
        %v2170 = vpop.permute.xlu0 %2169
        %2173 = vset.pattern.permute.xlu0 1
        %2174 = vperm.xlu0 %2173, %v2088
        %v2175 = vpop.permute.xlu0 %2174
        %2178 = vset.pattern.permute.xlu0 1
        %2179 = vperm.xlu0 %2178, %v2089
        %v2180 = vpop.permute.xlu0 %2179
        %2183 = vset.pattern.permute.xlu0 1
        %2184 = vperm.xlu0 %2183, %v2090
        %v2185 = vpop.permute.xlu0 %2184
        %2188 = vset.pattern.permute.xlu0 1
        %2189 = vperm.xlu0 %2188, %v2091
        %v2190 = vpop.permute.xlu0 %2189
        %2193 = vset.pattern.permute.xlu0 1
        %2194 = vperm.xlu0 %2193, %v2092
        %v2195 = vpop.permute.xlu0 %2194
        %2198 = vset.pattern.permute.xlu0 1
        %2199 = vperm.xlu0 %2198, %v2093
        %v2200 = vpop.permute.xlu0 %2199
        %2203 = vset.pattern.permute.xlu0 1
        %2204 = vperm.xlu0 %2203, %v2094
        %v2205 = vpop.permute.xlu0 %2204
        %2208 = vset.pattern.permute.xlu0 1
        %2209 = vperm.xlu0 %2208, %v2095
        %v2210 = vpop.permute.xlu0 %2209
        %2213 = vset.pattern.permute.xlu0 1
        %2214 = vperm.xlu0 %2213, %v2096
        %v2215 = vpop.permute.xlu0 %2214
        %2218 = vset.pattern.permute.xlu0 1
        %2219 = vperm.xlu0 %2218, %v2097
        %v2220 = vpop.permute.xlu0 %2219
        %2223 = vset.pattern.permute.xlu0 1
        %2224 = vperm.xlu0 %2223, %v2098
        %v2225 = vpop.permute.xlu0 %2224
        %2228 = vset.pattern.permute.xlu0 1
        %2229 = vperm.xlu0 %2228, %v2099
        %v2230 = vpop.permute.xlu0 %2229
        %2233 = vset.pattern.permute.xlu0 1
        %2234 = vperm.xlu0 %2233, %v2100
        %v2235 = vpop.permute.xlu0 %2234
        %2238 = vset.pattern.permute.xlu0 1
        %2239 = vperm.xlu0 %2238, %v2101
        %v2240 = vpop.permute.xlu0 %2239
        %2243 = vset.pattern.permute.xlu0 1
        %2244 = vperm.xlu0 %2243, %v2102
        %v2245 = vpop.permute.xlu0 %2244
        %2248 = vset.pattern.permute.xlu0 1
        %2249 = vperm.xlu0 %2248, %v2103
        %v2250 = vpop.permute.xlu0 %2249
        %2253 = vset.pattern.permute.xlu0 1
        %2254 = vperm.xlu0 %2253, %v2104
        %v2255 = vpop.permute.xlu0 %2254
        %2258 = vset.pattern.permute.xlu0 1
        %2259 = vperm.xlu0 %2258, %v2105
        %v2260 = vpop.permute.xlu0 %2259
        %2263 = vset.pattern.permute.xlu0 1
        %2264 = vperm.xlu0 %2263, %v2106
        %v2265 = vpop.permute.xlu0 %2264
        %v2267 = vlaneseq
        %v2268 = vshrl.u32 %v2267, 7
        %v2269 = vsub.s32 0, %v2268
        %v2270 = vrot.slane %v877, %v2269
        %v2271 = vmul.f32 %v2110, %v2270
        %v2272 = vmul.f32 %v2115, %v2270
        %v2273 = vmul.f32 %v2120, %v2270
        %v2274 = vmul.f32 %v2125, %v2270
        %v2275 = vmul.f32 %v2130, %v2270
        %v2276 = vmul.f32 %v2135, %v2270
        %v2277 = vmul.f32 %v2140, %v2270
        %v2278 = vmul.f32 %v2145, %v2270
        %v2279 = vmul.f32 %v2150, %v2270
        %v2280 = vmul.f32 %v2155, %v2270
        %v2281 = vmul.f32 %v2160, %v2270
        %v2282 = vmul.f32 %v2165, %v2270
        %v2283 = vmul.f32 %v2170, %v2270
        %v2284 = vmul.f32 %v2175, %v2270
        %v2285 = vmul.f32 %v2180, %v2270
        %v2286 = vmul.f32 %v2185, %v2270
        %v2287 = vmul.f32 %v2190, %v2270
        %v2288 = vmul.f32 %v2195, %v2270
        %v2289 = vmul.f32 %v2200, %v2270
        %v2290 = vmul.f32 %v2205, %v2270
        %v2291 = vmul.f32 %v2210, %v2270
        %v2292 = vmul.f32 %v2215, %v2270
        %v2293 = vmul.f32 %v2220, %v2270
        %v2294 = vmul.f32 %v2225, %v2270
        %v2295 = vmul.f32 %v2230, %v2270
        %v2296 = vmul.f32 %v2235, %v2270
        %v2297 = vmul.f32 %v2240, %v2270
        %v2298 = vmul.f32 %v2245, %v2270
        %v2299 = vmul.f32 %v2250, %v2270
        %v2300 = vmul.f32 %v2255, %v2270
        %v2301 = vmul.f32 %v2260, %v2270
        %v2302 = vmul.f32 %v2265, %v2270
        %2335 = vrot.lane.b32.xlu0 %v2271, 32
        %v2336 = vpop.permute.xlu0 %2335
        %2337 = vrot.lane.b32.xlu0 %v2272, 32
        %v2338 = vpop.permute.xlu0 %2337
        %2339 = vrot.lane.b32.xlu0 %v2273, 32
        %v2340 = vpop.permute.xlu0 %2339
        %2341 = vrot.lane.b32.xlu0 %v2274, 32
        %v2342 = vpop.permute.xlu0 %2341
        %2343 = vrot.lane.b32.xlu0 %v2275, 32
        %v2344 = vpop.permute.xlu0 %2343
        %2345 = vrot.lane.b32.xlu0 %v2276, 32
        %v2346 = vpop.permute.xlu0 %2345
        %2347 = vrot.lane.b32.xlu0 %v2277, 32
        %v2348 = vpop.permute.xlu0 %2347
        %2349 = vrot.lane.b32.xlu0 %v2278, 32
        %v2350 = vpop.permute.xlu0 %2349
        %2351 = vrot.lane.b32.xlu0 %v2279, 32
        %v2352 = vpop.permute.xlu0 %2351
        %2353 = vrot.lane.b32.xlu0 %v2280, 32
        %v2354 = vpop.permute.xlu0 %2353
        %2355 = vrot.lane.b32.xlu0 %v2281, 32
        %v2356 = vpop.permute.xlu0 %2355
        %2357 = vrot.lane.b32.xlu0 %v2282, 32
        %v2358 = vpop.permute.xlu0 %2357
        %2359 = vrot.lane.b32.xlu0 %v2283, 32
        %v2360 = vpop.permute.xlu0 %2359
        %2361 = vrot.lane.b32.xlu0 %v2284, 32
        %v2362 = vpop.permute.xlu0 %2361
        %2363 = vrot.lane.b32.xlu0 %v2285, 32
        %v2364 = vpop.permute.xlu0 %2363
        %2365 = vrot.lane.b32.xlu0 %v2286, 32
        %v2366 = vpop.permute.xlu0 %2365
        %2367 = vrot.lane.b32.xlu0 %v2287, 32
        %v2368 = vpop.permute.xlu0 %2367
        %2369 = vrot.lane.b32.xlu0 %v2288, 32
        %v2370 = vpop.permute.xlu0 %2369
        %2371 = vrot.lane.b32.xlu0 %v2289, 32
        %v2372 = vpop.permute.xlu0 %2371
        %2373 = vrot.lane.b32.xlu0 %v2290, 32
        %v2374 = vpop.permute.xlu0 %2373
        %2375 = vrot.lane.b32.xlu0 %v2291, 32
        %v2376 = vpop.permute.xlu0 %2375
        %2377 = vrot.lane.b32.xlu0 %v2292, 32
        %v2378 = vpop.permute.xlu0 %2377
        %2379 = vrot.lane.b32.xlu0 %v2293, 32
        %v2380 = vpop.permute.xlu0 %2379
        %2381 = vrot.lane.b32.xlu0 %v2294, 32
        %v2382 = vpop.permute.xlu0 %2381
        %2383 = vrot.lane.b32.xlu0 %v2295, 32
        %v2384 = vpop.permute.xlu0 %2383
        %2385 = vrot.lane.b32.xlu0 %v2296, 32
        %v2386 = vpop.permute.xlu0 %2385
        %2387 = vrot.lane.b32.xlu0 %v2297, 32
        %v2388 = vpop.permute.xlu0 %2387
        %2389 = vrot.lane.b32.xlu0 %v2298, 32
        %v2390 = vpop.permute.xlu0 %2389
        %2391 = vrot.lane.b32.xlu0 %v2299, 32
        %v2392 = vpop.permute.xlu0 %2391
        %2393 = vrot.lane.b32.xlu0 %v2300, 32
        %v2394 = vpop.permute.xlu0 %2393
        %2395 = vrot.lane.b32.xlu0 %v2301, 32
        %v2396 = vpop.permute.xlu0 %2395
        %2397 = vrot.lane.b32.xlu0 %v2302, 32
        %v2398 = vpop.permute.xlu0 %2397
        %v2431 = vadd.f32 %v1554, %v2336
        %v2432 = vadd.f32 %v1555, %v2338
        %v2433 = vadd.f32 %v1556, %v2340
        %v2434 = vadd.f32 %v1557, %v2342
        %v2435 = vadd.f32 %v1558, %v2344
        %v2436 = vadd.f32 %v1559, %v2346
        %v2437 = vadd.f32 %v1560, %v2348
        %v2438 = vadd.f32 %v1561, %v2350
        %v2439 = vadd.f32 %v1562, %v2352
        %v2440 = vadd.f32 %v1563, %v2354
        %v2441 = vadd.f32 %v1564, %v2356
        %v2442 = vadd.f32 %v1565, %v2358
        %v2443 = vadd.f32 %v1566, %v2360
        %v2444 = vadd.f32 %v1567, %v2362
        %v2445 = vadd.f32 %v1568, %v2364
        %v2446 = vadd.f32 %v1569, %v2366
        %v2447 = vadd.f32 %v1570, %v2368
        %v2448 = vadd.f32 %v1571, %v2370
        %v2449 = vadd.f32 %v1572, %v2372
        %v2450 = vadd.f32 %v1573, %v2374
        %v2451 = vadd.f32 %v1574, %v2376
        %v2452 = vadd.f32 %v1575, %v2378
        %v2453 = vadd.f32 %v1576, %v2380
        %v2454 = vadd.f32 %v1577, %v2382
        %v2455 = vadd.f32 %v1578, %v2384
        %v2456 = vadd.f32 %v1579, %v2386
        %v2457 = vadd.f32 %v1580, %v2388
        %v2458 = vadd.f32 %v1581, %v2390
        %v2459 = vadd.f32 %v1582, %v2392
        %v2460 = vadd.f32 %v1583, %v2394
        %v2461 = vadd.f32 %v1584, %v2396
        %v2462 = vadd.f32 %v1585, %v2398
        %v2463 = vmax.f32 %v2431, 0.0
        %v2464 = vmax.f32 %v2432, 0.0
        %v2465 = vmax.f32 %v2433, 0.0
        %v2466 = vmax.f32 %v2434, 0.0
        %v2467 = vmax.f32 %v2435, 0.0
        %v2468 = vmax.f32 %v2436, 0.0
        %v2469 = vmax.f32 %v2437, 0.0
        %v2470 = vmax.f32 %v2438, 0.0
        %v2471 = vmax.f32 %v2439, 0.0
        %v2472 = vmax.f32 %v2440, 0.0
        %v2473 = vmax.f32 %v2441, 0.0
        %v2474 = vmax.f32 %v2442, 0.0
        %v2475 = vmax.f32 %v2443, 0.0
        %v2476 = vmax.f32 %v2444, 0.0
        %v2477 = vmax.f32 %v2445, 0.0
        %v2478 = vmax.f32 %v2446, 0.0
        %v2479 = vmax.f32 %v2447, 0.0
        %v2480 = vmax.f32 %v2448, 0.0
        %v2481 = vmax.f32 %v2449, 0.0
        %v2482 = vmax.f32 %v2450, 0.0
        %v2483 = vmax.f32 %v2451, 0.0
        %v2484 = vmax.f32 %v2452, 0.0
        %v2485 = vmax.f32 %v2453, 0.0
        %v2486 = vmax.f32 %v2454, 0.0
        %v2487 = vmax.f32 %v2455, 0.0
        %v2488 = vmax.f32 %v2456, 0.0
        %v2489 = vmax.f32 %v2457, 0.0
        %v2490 = vmax.f32 %v2458, 0.0
        %v2491 = vmax.f32 %v2459, 0.0
        %v2492 = vmax.f32 %v2460, 0.0
        %v2493 = vmax.f32 %v2461, 0.0
        %v2494 = vmax.f32 %v2462, 0.0
        %v2495 = vld [vmem:[%s1 + $0x70] sm:$0xff]
        %v2496 = vld [vmem:[%s1 + $0x78] sm:$0xff]
        %v2497 = vld [vmem:[%s1 + $0x80] sm:$0xff]
        %v2498 = vld [vmem:[%s1 + $0x88] sm:$0xff]
        %v2499 = vld [vmem:[%s1 + $0x90] sm:$0xff]
        %v2500 = vld [vmem:[%s1 + $0x98] sm:$0xff]
        %v2501 = vld [vmem:[%s1 + $0xa0] sm:$0xff]
        %v2502 = vld [vmem:[%s1 + $0xa8] sm:$0xff]
        %v2503 = vld [vmem:[%s1 + $0xb0] sm:$0xff]
        %v2504 = vld [vmem:[%s1 + $0xb8] sm:$0xff]
        %v2505 = vld [vmem:[%s1 + $0xc0] sm:$0xff]
        %v2506 = vld [vmem:[%s1 + $0xc8] sm:$0xff]
        %v2507 = vld [vmem:[%s1 + $0xd0] sm:$0x1]
        %v2508 = vlaneseq
        %v2509 = vshrl.u32 %v2508, 7
        %v2510 = vsub.s32 0, %v2509
        %v2511 = vrot.slane %v2507, %v2510
        %2544 = vrot.lane.b32.xlu0 %v2463, 96
        %v2545 = vpop.permute.xlu0 %2544
        %2546 = vrot.lane.b32.xlu0 %v2464, 96
        %v2547 = vpop.permute.xlu0 %2546
        %2548 = vrot.lane.b32.xlu0 %v2465, 96
        %v2549 = vpop.permute.xlu0 %2548
        %2550 = vrot.lane.b32.xlu0 %v2466, 96
        %v2551 = vpop.permute.xlu0 %2550
        %2552 = vrot.lane.b32.xlu0 %v2467, 96
        %v2553 = vpop.permute.xlu0 %2552
        %2554 = vrot.lane.b32.xlu0 %v2468, 96
        %v2555 = vpop.permute.xlu0 %2554
        %2556 = vrot.lane.b32.xlu0 %v2469, 96
        %v2557 = vpop.permute.xlu0 %2556
        %2558 = vrot.lane.b32.xlu0 %v2470, 96
        %v2559 = vpop.permute.xlu0 %2558
        %2560 = vrot.lane.b32.xlu0 %v2471, 96
        %v2561 = vpop.permute.xlu0 %2560
        %2562 = vrot.lane.b32.xlu0 %v2472, 96
        %v2563 = vpop.permute.xlu0 %2562
        %2564 = vrot.lane.b32.xlu0 %v2473, 96
        %v2565 = vpop.permute.xlu0 %2564
        %2566 = vrot.lane.b32.xlu0 %v2474, 96
        %v2567 = vpop.permute.xlu0 %2566
        %2568 = vrot.lane.b32.xlu0 %v2475, 96
        %v2569 = vpop.permute.xlu0 %2568
        %2570 = vrot.lane.b32.xlu0 %v2476, 96
        %v2571 = vpop.permute.xlu0 %2570
        %2572 = vrot.lane.b32.xlu0 %v2477, 96
        %v2573 = vpop.permute.xlu0 %2572
        %2574 = vrot.lane.b32.xlu0 %v2478, 96
        %v2575 = vpop.permute.xlu0 %2574
        %2576 = vrot.lane.b32.xlu0 %v2479, 96
        %v2577 = vpop.permute.xlu0 %2576
        %2578 = vrot.lane.b32.xlu0 %v2480, 96
        %v2579 = vpop.permute.xlu0 %2578
        %2580 = vrot.lane.b32.xlu0 %v2481, 96
        %v2581 = vpop.permute.xlu0 %2580
        %2582 = vrot.lane.b32.xlu0 %v2482, 96
        %v2583 = vpop.permute.xlu0 %2582
        %2584 = vrot.lane.b32.xlu0 %v2483, 96
        %v2585 = vpop.permute.xlu0 %2584
        %2586 = vrot.lane.b32.xlu0 %v2484, 96
        %v2587 = vpop.permute.xlu0 %2586
        %2588 = vrot.lane.b32.xlu0 %v2485, 96
        %v2589 = vpop.permute.xlu0 %2588
        %2590 = vrot.lane.b32.xlu0 %v2486, 96
        %v2591 = vpop.permute.xlu0 %2590
        %2592 = vrot.lane.b32.xlu0 %v2487, 96
        %v2593 = vpop.permute.xlu0 %2592
        %2594 = vrot.lane.b32.xlu0 %v2488, 96
        %v2595 = vpop.permute.xlu0 %2594
        %2596 = vrot.lane.b32.xlu0 %v2489, 96
        %v2597 = vpop.permute.xlu0 %2596
        %2598 = vrot.lane.b32.xlu0 %v2490, 96
        %v2599 = vpop.permute.xlu0 %2598
        %2600 = vrot.lane.b32.xlu0 %v2491, 96
        %v2601 = vpop.permute.xlu0 %2600
        %2602 = vrot.lane.b32.xlu0 %v2492, 96
        %v2603 = vpop.permute.xlu0 %2602
        %2604 = vrot.lane.b32.xlu0 %v2493, 96
        %v2605 = vpop.permute.xlu0 %2604
        %2606 = vrot.lane.b32.xlu0 %v2494, 96
        %v2607 = vpop.permute.xlu0 %2606
        %vm2608 = vcmask 785408
        %v2609 = vsel %vm2608, %v2545, 0
        %v2611 = vsel %vm2608, %v2547, 0
        %v2613 = vsel %vm2608, %v2549, 0
        %v2615 = vsel %vm2608, %v2551, 0
        %v2617 = vsel %vm2608, %v2553, 0
        %v2619 = vsel %vm2608, %v2555, 0
        %v2621 = vsel %vm2608, %v2557, 0
        %v2623 = vsel %vm2608, %v2559, 0
        %v2625 = vsel %vm2608, %v2561, 0
        %v2627 = vsel %vm2608, %v2563, 0
        %v2629 = vsel %vm2608, %v2565, 0
        %v2631 = vsel %vm2608, %v2567, 0
        %v2633 = vsel %vm2608, %v2569, 0
        %v2635 = vsel %vm2608, %v2571, 0
        %v2637 = vsel %vm2608, %v2573, 0
        %v2639 = vsel %vm2608, %v2575, 0
        %v2641 = vsel %vm2608, %v2577, 0
        %v2643 = vsel %vm2608, %v2579, 0
        %v2645 = vsel %vm2608, %v2581, 0
        %v2647 = vsel %vm2608, %v2583, 0
        %v2649 = vsel %vm2608, %v2585, 0
        %v2651 = vsel %vm2608, %v2587, 0
        %v2653 = vsel %vm2608, %v2589, 0
        %v2655 = vsel %vm2608, %v2591, 0
        %v2657 = vsel %vm2608, %v2593, 0
        %v2659 = vsel %vm2608, %v2595, 0
        %v2661 = vsel %vm2608, %v2597, 0
        %v2663 = vsel %vm2608, %v2599, 0
        %v2665 = vsel %vm2608, %v2601, 0
        %v2667 = vsel %vm2608, %v2603, 0
        %v2669 = vsel %vm2608, %v2605, 0
        %v2671 = vsel %vm2608, %v2607, 0
        %2673 = vmatprep.subr.mxu0 0.0
        %2674 = vmatpush1.msra.mxu0 %v2495
        %2675 = vmatprep.subr.mxu0 0.0
        %2676 = vmatpush1.msra.mxu0 %v2496
        %2677 = vmatprep.subr.mxu0 0.0
        %2678 = vmatpush1.msra.mxu0 %v2497
        %2679 = vmatprep.subr.mxu0 0.0
        %2680 = vmatpush1.msra.mxu0 %v2498
        %2681 = vmatprep.subr.mxu0 0.0
        %2682 = vmatpush1.msra.mxu0 %v2499
        %2683 = vmatprep.subr.mxu0 0.0
        %2684 = vmatpush1.msra.mxu0 %v2500
        %2685 = vmatprep.subr.mxu0 0.0
        %2686 = vmatpush1.msra.mxu0 %v2501
        %2687 = vmatprep.subr.mxu0 0.0
        %2688 = vmatpush1.msra.mxu0 %v2502
        %2689 = vmatprep.subr.mxu0 0.0
        %2690 = vmatpush1.msra.mxu0 %v2503
        %2691 = vmatprep.subr.mxu0 0.0
        %2692 = vmatpush1.msra.mxu0 %v2504
        %2693 = vmatprep.subr.mxu0 0.0
        %2694 = vmatpush1.msra.mxu0 %v2505
        %2695 = vmatprep.subr.mxu0 0.0
        %2696 = vmatpush1.msra.mxu0 %v2506
        %2697 = vmatprep.subr.mxu0 0.0
        %2698 = vmatpush1.msra.mxu0 0.0
        %2699 = vmatprep.subr.mxu0 0.0
        %2700 = vmatpush1.msra.mxu0 0.0
        %2701 = vmatprep.subr.mxu0 0.0
        %2702 = vmatpush1.msra.mxu0 0.0
        %2703 = vmatprep.subr.mxu0 0.0
        %2704 = vmatpush1.msra.mxu0 0.0
        %2705 = vmatprep.subr.mxu0 0.0
        %2706 = vmatpush1.msra.mxu0 0.0
        %2707 = vmatprep.subr.mxu0 0.0
        %2708 = vmatpush1.msra.mxu0 0.0
        %2709 = vmatprep.subr.mxu0 0.0
        %2710 = vmatpush1.msra.mxu0 0.0
        %2711 = vmatprep.subr.mxu0 0.0
        %2712 = vmatpush1.msra.mxu0 0.0
        %2713 = vmatprep.subr.mxu0 0.0
        %2714 = vmatpush1.msra.mxu0 0.0
        %2715 = vmatprep.subr.mxu0 0.0
        %2716 = vmatpush1.msra.mxu0 0.0
        %2717 = vmatprep.subr.mxu0 0.0
        %2718 = vmatpush1.msra.mxu0 0.0
        %2719 = vmatprep.subr.mxu0 0.0
        %2720 = vmatpush1.msra.mxu0 0.0
        %2721 = vmatprep.subr.mxu0 0.0
        %2722 = vmatpush1.msra.mxu0 0.0
        %2723 = vmatprep.subr.mxu0 0.0
        %2724 = vmatpush1.msra.mxu0 0.0
        %2725 = vmatprep.subr.mxu0 0.0
        %2726 = vmatpush1.msra.mxu0 0.0
        %2727 = vmatprep.subr.mxu0 0.0
        %2728 = vmatpush1.msra.mxu0 0.0
        %2729 = vmatprep.subr.mxu0 0.0
        %2730 = vmatpush1.msra.mxu0 0.0
        %2731 = vmatprep.subr.mxu0 0.0
        %2732 = vmatpush1.msra.mxu0 0.0
        %2733 = vmatprep.subr.mxu0 0.0
        %2734 = vmatpush1.msra.mxu0 0.0
        %2735 = vmatprep.subr.mxu0 0.0
        %2736 = vmatpush1.msra.mxu0 0.0
        %2737 = vmatprep.mubr.f32.mxu0 0.0
        %2738 = vmatmul.mubr.f32.gmra.mrb[0].mxu0 %v2609
        %v2739 = vpop.f32.mrb[0].mxu0
        %v2740 = vadd.f32 %v2511, %v2739
        %v2741 = vpop.f32.mrb[0].mxu0
        %2742 = vmatprep.mubr.f32.mxu0 0.0
        %2743 = vmatmul.mubr.f32.gmra.mrb[0].mxu0 %v2611
        %v2744 = vpop.f32.mrb[0].mxu0
        %v2745 = vadd.f32 %v2511, %v2744
        %v2746 = vpop.f32.mrb[0].mxu0
        %2747 = vmatprep.mubr.f32.mxu0 0.0
        %2748 = vmatmul.mubr.f32.gmra.mrb[0].mxu0 %v2613
        %v2749 = vpop.f32.mrb[0].mxu0
        %v2750 = vadd.f32 %v2511, %v2749
        %v2751 = vpop.f32.mrb[0].mxu0
        %2752 = vmatprep.mubr.f32.mxu0 0.0
        %2753 = vmatmul.mubr.f32.gmra.mrb[0].mxu0 %v2615
        %v2754 = vpop.f32.mrb[0].mxu0
        %v2755 = vadd.f32 %v2511, %v2754
        %v2756 = vpop.f32.mrb[0].mxu0
        %2757 = vmatprep.mubr.f32.mxu0 0.0
        %2758 = vmatmul.mubr.f32.gmra.mrb[0].mxu0 %v2617
        %v2759 = vpop.f32.mrb[0].mxu0
        %v2760 = vadd.f32 %v2511, %v2759
        %v2761 = vpop.f32.mrb[0].mxu0
        %2762 = vmatprep.mubr.f32.mxu0 0.0
        %2763 = vmatmul.mubr.f32.gmra.mrb[0].mxu0 %v2619
        %v2764 = vpop.f32.mrb[0].mxu0
        %v2765 = vadd.f32 %v2511, %v2764
        %v2766 = vpop.f32.mrb[0].mxu0
        %2767 = vmatprep.mubr.f32.mxu0 0.0
        %2768 = vmatmul.mubr.f32.gmra.mrb[0].mxu0 %v2621
        %v2769 = vpop.f32.mrb[0].mxu0
        %v2770 = vadd.f32 %v2511, %v2769
        %v2771 = vpop.f32.mrb[0].mxu0
        %2772 = vmatprep.mubr.f32.mxu0 0.0
        %2773 = vmatmul.mubr.f32.gmra.mrb[0].mxu0 %v2623
        %v2774 = vpop.f32.mrb[0].mxu0
        %v2775 = vadd.f32 %v2511, %v2774
        %v2776 = vpop.f32.mrb[0].mxu0
        %2777 = vmatprep.mubr.f32.mxu0 0.0
        %2778 = vmatmul.mubr.f32.gmra.mrb[0].mxu0 %v2625
        %v2779 = vpop.f32.mrb[0].mxu0
        %v2780 = vadd.f32 %v2511, %v2779
        %v2781 = vpop.f32.mrb[0].mxu0
        %2782 = vmatprep.mubr.f32.mxu0 0.0
        %2783 = vmatmul.mubr.f32.gmra.mrb[0].mxu0 %v2627
        %v2784 = vpop.f32.mrb[0].mxu0
        %v2785 = vadd.f32 %v2511, %v2784
        %v2786 = vpop.f32.mrb[0].mxu0
        %2787 = vmatprep.mubr.f32.mxu0 0.0
        %2788 = vmatmul.mubr.f32.gmra.mrb[0].mxu0 %v2629
        %v2789 = vpop.f32.mrb[0].mxu0
        %v2790 = vadd.f32 %v2511, %v2789
        %v2791 = vpop.f32.mrb[0].mxu0
        %2792 = vmatprep.mubr.f32.mxu0 0.0
        %2793 = vmatmul.mubr.f32.gmra.mrb[0].mxu0 %v2631
        %v2794 = vpop.f32.mrb[0].mxu0
        %v2795 = vadd.f32 %v2511, %v2794
        %v2796 = vpop.f32.mrb[0].mxu0
        %2797 = vmatprep.mubr.f32.mxu0 0.0
        %2798 = vmatmul.mubr.f32.gmra.mrb[0].mxu0 %v2633
        %v2799 = vpop.f32.mrb[0].mxu0
        %v2800 = vadd.f32 %v2511, %v2799
        %v2801 = vpop.f32.mrb[0].mxu0
        %2802 = vmatprep.mubr.f32.mxu0 0.0
        %2803 = vmatmul.mubr.f32.gmra.mrb[0].mxu0 %v2635
        %v2804 = vpop.f32.mrb[0].mxu0
        %v2805 = vadd.f32 %v2511, %v2804
        %v2806 = vpop.f32.mrb[0].mxu0
        %2807 = vmatprep.mubr.f32.mxu0 0.0
        %2808 = vmatmul.mubr.f32.gmra.mrb[0].mxu0 %v2637
        %v2809 = vpop.f32.mrb[0].mxu0
        %v2810 = vadd.f32 %v2511, %v2809
        %v2811 = vpop.f32.mrb[0].mxu0
        %2812 = vmatprep.mubr.f32.mxu0 0.0
        %2813 = vmatmul.mubr.f32.gmra.mrb[0].mxu0 %v2639
        %v2814 = vpop.f32.mrb[0].mxu0
        %v2815 = vadd.f32 %v2511, %v2814
        %v2816 = vpop.f32.mrb[0].mxu0
        %2817 = vmatprep.mubr.f32.mxu0 0.0
        %2818 = vmatmul.mubr.f32.gmra.mrb[0].mxu0 %v2641
        %v2819 = vpop.f32.mrb[0].mxu0
        %v2820 = vadd.f32 %v2511, %v2819
        %v2821 = vpop.f32.mrb[0].mxu0
        %2822 = vmatprep.mubr.f32.mxu0 0.0
        %2823 = vmatmul.mubr.f32.gmra.mrb[0].mxu0 %v2643
        %v2824 = vpop.f32.mrb[0].mxu0
        %v2825 = vadd.f32 %v2511, %v2824
        %v2826 = vpop.f32.mrb[0].mxu0
        %2827 = vmatprep.mubr.f32.mxu0 0.0
        %2828 = vmatmul.mubr.f32.gmra.mrb[0].mxu0 %v2645
        %v2829 = vpop.f32.mrb[0].mxu0
        %v2830 = vadd.f32 %v2511, %v2829
        %v2831 = vpop.f32.mrb[0].mxu0
        %2832 = vmatprep.mubr.f32.mxu0 0.0
        %2833 = vmatmul.mubr.f32.gmra.mrb[0].mxu0 %v2647
        %v2834 = vpop.f32.mrb[0].mxu0
        %v2835 = vadd.f32 %v2511, %v2834
        %v2836 = vpop.f32.mrb[0].mxu0
        %2837 = vmatprep.mubr.f32.mxu0 0.0
        %2838 = vmatmul.mubr.f32.gmra.mrb[0].mxu0 %v2649
        %v2839 = vpop.f32.mrb[0].mxu0
        %v2840 = vadd.f32 %v2511, %v2839
        %v2841 = vpop.f32.mrb[0].mxu0
        %2842 = vmatprep.mubr.f32.mxu0 0.0
        %2843 = vmatmul.mubr.f32.gmra.mrb[0].mxu0 %v2651
        %v2844 = vpop.f32.mrb[0].mxu0
        %v2845 = vadd.f32 %v2511, %v2844
        %v2846 = vpop.f32.mrb[0].mxu0
        %2847 = vmatprep.mubr.f32.mxu0 0.0
        %2848 = vmatmul.mubr.f32.gmra.mrb[0].mxu0 %v2653
        %v2849 = vpop.f32.mrb[0].mxu0
        %v2850 = vadd.f32 %v2511, %v2849
        %v2851 = vpop.f32.mrb[0].mxu0
        %2852 = vmatprep.mubr.f32.mxu0 0.0
        %2853 = vmatmul.mubr.f32.gmra.mrb[0].mxu0 %v2655
        %v2854 = vpop.f32.mrb[0].mxu0
        %v2855 = vadd.f32 %v2511, %v2854
        %v2856 = vpop.f32.mrb[0].mxu0
        %2857 = vmatprep.mubr.f32.mxu0 0.0
        %2858 = vmatmul.mubr.f32.gmra.mrb[0].mxu0 %v2657
        %v2859 = vpop.f32.mrb[0].mxu0
        %v2860 = vadd.f32 %v2511, %v2859
        %v2861 = vpop.f32.mrb[0].mxu0
        %2862 = vmatprep.mubr.f32.mxu0 0.0
        %2863 = vmatmul.mubr.f32.gmra.mrb[0].mxu0 %v2659
        %v2864 = vpop.f32.mrb[0].mxu0
        %v2865 = vadd.f32 %v2511, %v2864
        %v2866 = vpop.f32.mrb[0].mxu0
        %2867 = vmatprep.mubr.f32.mxu0 0.0
        %2868 = vmatmul.mubr.f32.gmra.mrb[0].mxu0 %v2661
        %v2869 = vpop.f32.mrb[0].mxu0
        %v2870 = vadd.f32 %v2511, %v2869
        %v2871 = vpop.f32.mrb[0].mxu0
        %2872 = vmatprep.mubr.f32.mxu0 0.0
        %2873 = vmatmul.mubr.f32.gmra.mrb[0].mxu0 %v2663
        %v2874 = vpop.f32.mrb[0].mxu0
        %v2875 = vadd.f32 %v2511, %v2874
        %v2876 = vpop.f32.mrb[0].mxu0
        %2877 = vmatprep.mubr.f32.mxu0 0.0
        %2878 = vmatmul.mubr.f32.gmra.mrb[0].mxu0 %v2665
        %v2879 = vpop.f32.mrb[0].mxu0
        %v2880 = vadd.f32 %v2511, %v2879
        %v2881 = vpop.f32.mrb[0].mxu0
        %2882 = vmatprep.mubr.f32.mxu0 0.0
        %2883 = vmatmul.mubr.f32.gmra.mrb[0].mxu0 %v2667
        %v2884 = vpop.f32.mrb[0].mxu0
        %v2885 = vadd.f32 %v2511, %v2884
        %v2886 = vpop.f32.mrb[0].mxu0
        %2887 = vmatprep.mubr.f32.mxu0 0.0
        %2888 = vmatmul.mubr.f32.gmra.mrb[0].mxu0 %v2669
        %v2889 = vpop.f32.mrb[0].mxu0
        %v2890 = vadd.f32 %v2511, %v2889
        %v2891 = vpop.f32.mrb[0].mxu0
        %2892 = vmatprep.mubr.f32.mxu0 0.0
        %2893 = vmatmul.mubr.f32.gmra.mrb[0].mxu0 %v2671
        %v2894 = vpop.f32.mrb[0].mxu0
        %v2895 = vadd.f32 %v2511, %v2894
        %v2896 = vpop.f32.mrb[0].mxu0
        %2897 = vdwg.mxu0
        %2930 = vrot.lane.b32.xlu0 %v2740, 96
        %v2931 = vpop.permute.xlu0 %2930
        %2932 = vrot.lane.b32.xlu0 %v2745, 96
        %v2933 = vpop.permute.xlu0 %2932
        %2934 = vrot.lane.b32.xlu0 %v2750, 96
        %v2935 = vpop.permute.xlu0 %2934
        %2936 = vrot.lane.b32.xlu0 %v2755, 96
        %v2937 = vpop.permute.xlu0 %2936
        %2938 = vrot.lane.b32.xlu0 %v2760, 96
        %v2939 = vpop.permute.xlu0 %2938
        %2940 = vrot.lane.b32.xlu0 %v2765, 96
        %v2941 = vpop.permute.xlu0 %2940
        %2942 = vrot.lane.b32.xlu0 %v2770, 96
        %v2943 = vpop.permute.xlu0 %2942
        %2944 = vrot.lane.b32.xlu0 %v2775, 96
        %v2945 = vpop.permute.xlu0 %2944
        %2946 = vrot.lane.b32.xlu0 %v2780, 96
        %v2947 = vpop.permute.xlu0 %2946
        %2948 = vrot.lane.b32.xlu0 %v2785, 96
        %v2949 = vpop.permute.xlu0 %2948
        %2950 = vrot.lane.b32.xlu0 %v2790, 96
        %v2951 = vpop.permute.xlu0 %2950
        %2952 = vrot.lane.b32.xlu0 %v2795, 96
        %v2953 = vpop.permute.xlu0 %2952
        %2954 = vrot.lane.b32.xlu0 %v2800, 96
        %v2955 = vpop.permute.xlu0 %2954
        %2956 = vrot.lane.b32.xlu0 %v2805, 96
        %v2957 = vpop.permute.xlu0 %2956
        %2958 = vrot.lane.b32.xlu0 %v2810, 96
        %v2959 = vpop.permute.xlu0 %2958
        %2960 = vrot.lane.b32.xlu0 %v2815, 96
        %v2961 = vpop.permute.xlu0 %2960
        %2962 = vrot.lane.b32.xlu0 %v2820, 96
        %v2963 = vpop.permute.xlu0 %2962
        %2964 = vrot.lane.b32.xlu0 %v2825, 96
        %v2965 = vpop.permute.xlu0 %2964
        %2966 = vrot.lane.b32.xlu0 %v2830, 96
        %v2967 = vpop.permute.xlu0 %2966
        %2968 = vrot.lane.b32.xlu0 %v2835, 96
        %v2969 = vpop.permute.xlu0 %2968
        %2970 = vrot.lane.b32.xlu0 %v2840, 96
        %v2971 = vpop.permute.xlu0 %2970
        %2972 = vrot.lane.b32.xlu0 %v2845, 96
        %v2973 = vpop.permute.xlu0 %2972
        %2974 = vrot.lane.b32.xlu0 %v2850, 96
        %v2975 = vpop.permute.xlu0 %2974
        %2976 = vrot.lane.b32.xlu0 %v2855, 96
        %v2977 = vpop.permute.xlu0 %2976
        %2978 = vrot.lane.b32.xlu0 %v2860, 96
        %v2979 = vpop.permute.xlu0 %2978
        %2980 = vrot.lane.b32.xlu0 %v2865, 96
        %v2981 = vpop.permute.xlu0 %2980
        %2982 = vrot.lane.b32.xlu0 %v2870, 96
        %v2983 = vpop.permute.xlu0 %2982
        %2984 = vrot.lane.b32.xlu0 %v2875, 96
        %v2985 = vpop.permute.xlu0 %2984
        %2986 = vrot.lane.b32.xlu0 %v2880, 96
        %v2987 = vpop.permute.xlu0 %2986
        %2988 = vrot.lane.b32.xlu0 %v2885, 96
        %v2989 = vpop.permute.xlu0 %2988
        %2990 = vrot.lane.b32.xlu0 %v2890, 96
        %v2991 = vpop.permute.xlu0 %2990
        %2992 = vrot.lane.b32.xlu0 %v2895, 96
        %v2993 = vpop.permute.xlu0 %2992
        %v3026 = vmul.f32 %v718, %v2931
        %v3027 = vmul.f32 %v723, %v2933
        %v3028 = vmul.f32 %v728, %v2935
        %v3029 = vmul.f32 %v733, %v2937
        %v3030 = vmul.f32 %v738, %v2939
        %v3031 = vmul.f32 %v743, %v2941
        %v3032 = vmul.f32 %v748, %v2943
        %v3033 = vmul.f32 %v753, %v2945
        %v3034 = vmul.f32 %v758, %v2947
        %v3035 = vmul.f32 %v763, %v2949
        %v3036 = vmul.f32 %v768, %v2951
        %v3037 = vmul.f32 %v773, %v2953
        %v3038 = vmul.f32 %v778, %v2955
        %v3039 = vmul.f32 %v783, %v2957
        %v3040 = vmul.f32 %v788, %v2959
        %v3041 = vmul.f32 %v793, %v2961
        %v3042 = vmul.f32 %v798, %v2963
        %v3043 = vmul.f32 %v803, %v2965
        %v3044 = vmul.f32 %v808, %v2967
        %v3045 = vmul.f32 %v813, %v2969
        %v3046 = vmul.f32 %v818, %v2971
        %v3047 = vmul.f32 %v823, %v2973
        %v3048 = vmul.f32 %v828, %v2975
        %v3049 = vmul.f32 %v833, %v2977
        %v3050 = vmul.f32 %v838, %v2979
        %v3051 = vmul.f32 %v843, %v2981
        %v3052 = vmul.f32 %v848, %v2983
        %v3053 = vmul.f32 %v853, %v2985
        %v3054 = vmul.f32 %v858, %v2987
        %v3055 = vmul.f32 %v863, %v2989
        %v3056 = vmul.f32 %v868, %v2991
        %v3057 = vmul.f32 %v873, %v2993
        %3058 = vrot.lane.b32.xlu0 %v2740, 120
        %v3059 = vpop.permute.xlu0 %3058
        %3060 = vrot.lane.b32.xlu0 %v2745, 120
        %v3061 = vpop.permute.xlu0 %3060
        %3062 = vrot.lane.b32.xlu0 %v2750, 120
        %v3063 = vpop.permute.xlu0 %3062
        %3064 = vrot.lane.b32.xlu0 %v2755, 120
        %v3065 = vpop.permute.xlu0 %3064
        %3066 = vrot.lane.b32.xlu0 %v2760, 120
        %v3067 = vpop.permute.xlu0 %3066
        %3068 = vrot.lane.b32.xlu0 %v2765, 120
        %v3069 = vpop.permute.xlu0 %3068
        %3070 = vrot.lane.b32.xlu0 %v2770, 120
        %v3071 = vpop.permute.xlu0 %3070
        %3072 = vrot.lane.b32.xlu0 %v2775, 120
        %v3073 = vpop.permute.xlu0 %3072
        %3074 = vrot.lane.b32.xlu0 %v2780, 120
        %v3075 = vpop.permute.xlu0 %3074
        %3076 = vrot.lane.b32.xlu0 %v2785, 120
        %v3077 = vpop.permute.xlu0 %3076
        %3078 = vrot.lane.b32.xlu0 %v2790, 120
        %v3079 = vpop.permute.xlu0 %3078
        %3080 = vrot.lane.b32.xlu0 %v2795, 120
        %v3081 = vpop.permute.xlu0 %3080
        %3082 = vrot.lane.b32.xlu0 %v2800, 120
        %v3083 = vpop.permute.xlu0 %3082
        %3084 = vrot.lane.b32.xlu0 %v2805, 120
        %v3085 = vpop.permute.xlu0 %3084
        %3086 = vrot.lane.b32.xlu0 %v2810, 120
        %v3087 = vpop.permute.xlu0 %3086
        %3088 = vrot.lane.b32.xlu0 %v2815, 120
        %v3089 = vpop.permute.xlu0 %3088
        %3090 = vrot.lane.b32.xlu0 %v2820, 120
        %v3091 = vpop.permute.xlu0 %3090
        %3092 = vrot.lane.b32.xlu0 %v2825, 120
        %v3093 = vpop.permute.xlu0 %3092
        %3094 = vrot.lane.b32.xlu0 %v2830, 120
        %v3095 = vpop.permute.xlu0 %3094
        %3096 = vrot.lane.b32.xlu0 %v2835, 120
        %v3097 = vpop.permute.xlu0 %3096
        %3098 = vrot.lane.b32.xlu0 %v2840, 120
        %v3099 = vpop.permute.xlu0 %3098
        %3100 = vrot.lane.b32.xlu0 %v2845, 120
        %v3101 = vpop.permute.xlu0 %3100
        %3102 = vrot.lane.b32.xlu0 %v2850, 120
        %v3103 = vpop.permute.xlu0 %3102
        %3104 = vrot.lane.b32.xlu0 %v2855, 120
        %v3105 = vpop.permute.xlu0 %3104
        %3106 = vrot.lane.b32.xlu0 %v2860, 120
        %v3107 = vpop.permute.xlu0 %3106
        %3108 = vrot.lane.b32.xlu0 %v2865, 120
        %v3109 = vpop.permute.xlu0 %3108
        %3110 = vrot.lane.b32.xlu0 %v2870, 120
        %v3111 = vpop.permute.xlu0 %3110
        %3112 = vrot.lane.b32.xlu0 %v2875, 120
        %v3113 = vpop.permute.xlu0 %3112
        %3114 = vrot.lane.b32.xlu0 %v2880, 120
        %v3115 = vpop.permute.xlu0 %3114
        %3116 = vrot.lane.b32.xlu0 %v2885, 120
        %v3117 = vpop.permute.xlu0 %3116
        %3118 = vrot.lane.b32.xlu0 %v2890, 120
        %v3119 = vpop.permute.xlu0 %3118
        %3120 = vrot.lane.b32.xlu0 %v2895, 120
        %v3121 = vpop.permute.xlu0 %3120
        %v3154 = vmul.f32 %v2740, %v3059
        %v3155 = vmul.f32 %v2745, %v3061
        %v3156 = vmul.f32 %v2750, %v3063
        %v3157 = vmul.f32 %v2755, %v3065
        %v3158 = vmul.f32 %v2760, %v3067
        %v3159 = vmul.f32 %v2765, %v3069
        %v3160 = vmul.f32 %v2770, %v3071
        %v3161 = vmul.f32 %v2775, %v3073
        %v3162 = vmul.f32 %v2780, %v3075
        %v3163 = vmul.f32 %v2785, %v3077
        %v3164 = vmul.f32 %v2790, %v3079
        %v3165 = vmul.f32 %v2795, %v3081
        %v3166 = vmul.f32 %v2800, %v3083
        %v3167 = vmul.f32 %v2805, %v3085
        %v3168 = vmul.f32 %v2810, %v3087
        %v3169 = vmul.f32 %v2815, %v3089
        %v3170 = vmul.f32 %v2820, %v3091
        %v3171 = vmul.f32 %v2825, %v3093
        %v3172 = vmul.f32 %v2830, %v3095
        %v3173 = vmul.f32 %v2835, %v3097
        %v3174 = vmul.f32 %v2840, %v3099
        %v3175 = vmul.f32 %v2845, %v3101
        %v3176 = vmul.f32 %v2850, %v3103
        %v3177 = vmul.f32 %v2855, %v3105
        %v3178 = vmul.f32 %v2860, %v3107
        %v3179 = vmul.f32 %v2865, %v3109
        %v3180 = vmul.f32 %v2870, %v3111
        %v3181 = vmul.f32 %v2875, %v3113
        %v3182 = vmul.f32 %v2880, %v3115
        %v3183 = vmul.f32 %v2885, %v3117
        %v3184 = vmul.f32 %v2890, %v3119
        %v3185 = vmul.f32 %v2895, %v3121
        %3218 = vrot.lane.b32.xlu0 %v3154, 120
        %v3219 = vpop.permute.xlu0 %3218
        %3220 = vrot.lane.b32.xlu0 %v3155, 120
        %v3221 = vpop.permute.xlu0 %3220
        %3222 = vrot.lane.b32.xlu0 %v3156, 120
        %v3223 = vpop.permute.xlu0 %3222
        %3224 = vrot.lane.b32.xlu0 %v3157, 120
        %v3225 = vpop.permute.xlu0 %3224
        %3226 = vrot.lane.b32.xlu0 %v3158, 120
        %v3227 = vpop.permute.xlu0 %3226
        %3228 = vrot.lane.b32.xlu0 %v3159, 120
        %v3229 = vpop.permute.xlu0 %3228
        %3230 = vrot.lane.b32.xlu0 %v3160, 120
        %v3231 = vpop.permute.xlu0 %3230
        %3232 = vrot.lane.b32.xlu0 %v3161, 120
        %v3233 = vpop.permute.xlu0 %3232
        %3234 = vrot.lane.b32.xlu0 %v3162, 120
        %v3235 = vpop.permute.xlu0 %3234
        %3236 = vrot.lane.b32.xlu0 %v3163, 120
        %v3237 = vpop.permute.xlu0 %3236
        %3238 = vrot.lane.b32.xlu0 %v3164, 120
        %v3239 = vpop.permute.xlu0 %3238
        %3240 = vrot.lane.b32.xlu0 %v3165, 120
        %v3241 = vpop.permute.xlu0 %3240
        %3242 = vrot.lane.b32.xlu0 %v3166, 120
        %v3243 = vpop.permute.xlu0 %3242
        %3244 = vrot.lane.b32.xlu0 %v3167, 120
        %v3245 = vpop.permute.xlu0 %3244
        %3246 = vrot.lane.b32.xlu0 %v3168, 120
        %v3247 = vpop.permute.xlu0 %3246
        %3248 = vrot.lane.b32.xlu0 %v3169, 120
        %v3249 = vpop.permute.xlu0 %3248
        %3250 = vrot.lane.b32.xlu0 %v3170, 120
        %v3251 = vpop.permute.xlu0 %3250
        %3252 = vrot.lane.b32.xlu0 %v3171, 120
        %v3253 = vpop.permute.xlu0 %3252
        %3254 = vrot.lane.b32.xlu0 %v3172, 120
        %v3255 = vpop.permute.xlu0 %3254
        %3256 = vrot.lane.b32.xlu0 %v3173, 120
        %v3257 = vpop.permute.xlu0 %3256
        %3258 = vrot.lane.b32.xlu0 %v3174, 120
        %v3259 = vpop.permute.xlu0 %3258
        %3260 = vrot.lane.b32.xlu0 %v3175, 120
        %v3261 = vpop.permute.xlu0 %3260
        %3262 = vrot.lane.b32.xlu0 %v3176, 120
        %v3263 = vpop.permute.xlu0 %3262
        %3264 = vrot.lane.b32.xlu0 %v3177, 120
        %v3265 = vpop.permute.xlu0 %3264
        %3266 = vrot.lane.b32.xlu0 %v3178, 120
        %v3267 = vpop.permute.xlu0 %3266
        %3268 = vrot.lane.b32.xlu0 %v3179, 120
        %v3269 = vpop.permute.xlu0 %3268
        %3270 = vrot.lane.b32.xlu0 %v3180, 120
        %v3271 = vpop.permute.xlu0 %3270
        %3272 = vrot.lane.b32.xlu0 %v3181, 120
        %v3273 = vpop.permute.xlu0 %3272
        %3274 = vrot.lane.b32.xlu0 %v3182, 120
        %v3275 = vpop.permute.xlu0 %3274
        %3276 = vrot.lane.b32.xlu0 %v3183, 120
        %v3277 = vpop.permute.xlu0 %3276
        %3278 = vrot.lane.b32.xlu0 %v3184, 120
        %v3279 = vpop.permute.xlu0 %3278
        %3280 = vrot.lane.b32.xlu0 %v3185, 120
        %v3281 = vpop.permute.xlu0 %3280
        %vm3282 = vcmask 64512
        %v3284 = vsel %vm3282, 1.0, 0
        %v3286 = vsel %vm3282, %v3219, 0
        %v3288 = vsel %vm3282, %v3221, 0
        %v3290 = vsel %vm3282, %v3223, 0
        %v3292 = vsel %vm3282, %v3225, 0
        %v3294 = vsel %vm3282, %v3227, 0
        %v3296 = vsel %vm3282, %v3229, 0
        %v3298 = vsel %vm3282, %v3231, 0
        %v3300 = vsel %vm3282, %v3233, 0
        %v3302 = vsel %vm3282, %v3235, 0
        %v3304 = vsel %vm3282, %v3237, 0
        %v3306 = vsel %vm3282, %v3239, 0
        %v3308 = vsel %vm3282, %v3241, 0
        %v3310 = vsel %vm3282, %v3243, 0
        %v3312 = vsel %vm3282, %v3245, 0
        %v3314 = vsel %vm3282, %v3247, 0
        %v3316 = vsel %vm3282, %v3249, 0
        %v3318 = vsel %vm3282, %v3251, 0
        %v3320 = vsel %vm3282, %v3253, 0
        %v3322 = vsel %vm3282, %v3255, 0
        %v3324 = vsel %vm3282, %v3257, 0
        %v3326 = vsel %vm3282, %v3259, 0
        %v3328 = vsel %vm3282, %v3261, 0
        %v3330 = vsel %vm3282, %v3263, 0
        %v3332 = vsel %vm3282, %v3265, 0
        %v3334 = vsel %vm3282, %v3267, 0
        %v3336 = vsel %vm3282, %v3269, 0
        %v3338 = vsel %vm3282, %v3271, 0
        %v3340 = vsel %vm3282, %v3273, 0
        %v3342 = vsel %vm3282, %v3275, 0
        %v3344 = vsel %vm3282, %v3277, 0
        %v3346 = vsel %vm3282, %v3279, 0
        %v3348 = vsel %vm3282, %v3281, 0
        %3350 = vmatprep.subr.mxu0 0.0
        %3351 = vmatpush1.xpose.msra.mxu0 %v3286
        %3352 = vmatprep.subr.mxu0 0.0
        %3353 = vmatpush1.xpose.msra.mxu0 %v3288
        %3354 = vmatprep.subr.mxu0 0.0
        %3355 = vmatpush1.xpose.msra.mxu0 %v3290
        %3356 = vmatprep.subr.mxu0 0.0
        %3357 = vmatpush1.xpose.msra.mxu0 %v3292
        %3358 = vmatprep.subr.mxu0 0.0
        %3359 = vmatpush1.xpose.msra.mxu0 %v3294
        %3360 = vmatprep.subr.mxu0 0.0
        %3361 = vmatpush1.xpose.msra.mxu0 %v3296
        %3362 = vmatprep.subr.mxu0 0.0
        %3363 = vmatpush1.xpose.msra.mxu0 %v3298
        %3364 = vmatprep.subr.mxu0 0.0
        %3365 = vmatpush1.xpose.msra.mxu0 %v3300
        %3366 = vmatprep.subr.mxu0 0.0
        %3367 = vmatpush1.xpose.msra.mxu0 %v3302
        %3368 = vmatprep.subr.mxu0 0.0
        %3369 = vmatpush1.xpose.msra.mxu0 %v3304
        %3370 = vmatprep.subr.mxu0 0.0
        %3371 = vmatpush1.xpose.msra.mxu0 %v3306
        %3372 = vmatprep.subr.mxu0 0.0
        %3373 = vmatpush1.xpose.msra.mxu0 %v3308
        %3374 = vmatprep.subr.mxu0 0.0
        %3375 = vmatpush1.xpose.msra.mxu0 %v3310
        %3376 = vmatprep.subr.mxu0 0.0
        %3377 = vmatpush1.xpose.msra.mxu0 %v3312
        %3378 = vmatprep.subr.mxu0 0.0
        %3379 = vmatpush1.xpose.msra.mxu0 %v3314
        %3380 = vmatprep.subr.mxu0 0.0
        %3381 = vmatpush1.xpose.msra.mxu0 %v3316
        %3382 = vmatprep.subr.mxu0 0.0
        %3383 = vmatpush1.xpose.msra.mxu0 %v3318
        %3384 = vmatprep.subr.mxu0 0.0
        %3385 = vmatpush1.xpose.msra.mxu0 %v3320
        %3386 = vmatprep.subr.mxu0 0.0
        %3387 = vmatpush1.xpose.msra.mxu0 %v3322
        %3388 = vmatprep.subr.mxu0 0.0
        %3389 = vmatpush1.xpose.msra.mxu0 %v3324
        %3390 = vmatprep.subr.mxu0 0.0
        %3391 = vmatpush1.xpose.msra.mxu0 %v3326
        %3392 = vmatprep.subr.mxu0 0.0
        %3393 = vmatpush1.xpose.msra.mxu0 %v3328
        %3394 = vmatprep.subr.mxu0 0.0
        %3395 = vmatpush1.xpose.msra.mxu0 %v3330
        %3396 = vmatprep.subr.mxu0 0.0
        %3397 = vmatpush1.xpose.msra.mxu0 %v3332
        %3398 = vmatprep.subr.mxu0 0.0
        %3399 = vmatpush1.xpose.msra.mxu0 %v3334
        %3400 = vmatprep.subr.mxu0 0.0
        %3401 = vmatpush1.xpose.msra.mxu0 %v3336
        %3402 = vmatprep.subr.mxu0 0.0
        %3403 = vmatpush1.xpose.msra.mxu0 %v3338
        %3404 = vmatprep.subr.mxu0 0.0
        %3405 = vmatpush1.xpose.msra.mxu0 %v3340
        %3406 = vmatprep.subr.mxu0 0.0
        %3407 = vmatpush1.xpose.msra.mxu0 %v3342
        %3408 = vmatprep.subr.mxu0 0.0
        %3409 = vmatpush1.xpose.msra.mxu0 %v3344
        %3410 = vmatprep.subr.mxu0 0.0
        %3411 = vmatpush1.xpose.msra.mxu0 %v3346
        %3412 = vmatprep.subr.mxu0 0.0
        %3413 = vmatpush1.xpose.msra.mxu0 %v3348
        %3414 = vmatprep.mubr.f32.mxu0 0.0
        %3415 = vmatmul.mubr.f32.gmra.mrb[0].mxu0 %v3284
        %v3416 = vpop.f32.mrb[0].mxu0
        %v3417 = vadd.f32 0.0, %v3416
        %v3418 = vpop.f32.mrb[0].mxu0
        %v3419 = vadd.f32 0.0, %v3418
        %3420 = vdwg.mxu0
        %3453 = vrot.lane.b32.xlu0 %v3026, 32
        %v3454 = vpop.permute.xlu0 %3453
        %3455 = vrot.lane.b32.xlu0 %v3027, 32
        %v3456 = vpop.permute.xlu0 %3455
        %3457 = vrot.lane.b32.xlu0 %v3028, 32
        %v3458 = vpop.permute.xlu0 %3457
        %3459 = vrot.lane.b32.xlu0 %v3029, 32
        %v3460 = vpop.permute.xlu0 %3459
        %3461 = vrot.lane.b32.xlu0 %v3030, 32
        %v3462 = vpop.permute.xlu0 %3461
        %3463 = vrot.lane.b32.xlu0 %v3031, 32
        %v3464 = vpop.permute.xlu0 %3463
        %3465 = vrot.lane.b32.xlu0 %v3032, 32
        %v3466 = vpop.permute.xlu0 %3465
        %3467 = vrot.lane.b32.xlu0 %v3033, 32
        %v3468 = vpop.permute.xlu0 %3467
        %3469 = vrot.lane.b32.xlu0 %v3034, 32
        %v3470 = vpop.permute.xlu0 %3469
        %3471 = vrot.lane.b32.xlu0 %v3035, 32
        %v3472 = vpop.permute.xlu0 %3471
        %3473 = vrot.lane.b32.xlu0 %v3036, 32
        %v3474 = vpop.permute.xlu0 %3473
        %3475 = vrot.lane.b32.xlu0 %v3037, 32
        %v3476 = vpop.permute.xlu0 %3475
        %3477 = vrot.lane.b32.xlu0 %v3038, 32
        %v3478 = vpop.permute.xlu0 %3477
        %3479 = vrot.lane.b32.xlu0 %v3039, 32
        %v3480 = vpop.permute.xlu0 %3479
        %3481 = vrot.lane.b32.xlu0 %v3040, 32
        %v3482 = vpop.permute.xlu0 %3481
        %3483 = vrot.lane.b32.xlu0 %v3041, 32
        %v3484 = vpop.permute.xlu0 %3483
        %3485 = vrot.lane.b32.xlu0 %v3042, 32
        %v3486 = vpop.permute.xlu0 %3485
        %3487 = vrot.lane.b32.xlu0 %v3043, 32
        %v3488 = vpop.permute.xlu0 %3487
        %3489 = vrot.lane.b32.xlu0 %v3044, 32
        %v3490 = vpop.permute.xlu0 %3489
        %3491 = vrot.lane.b32.xlu0 %v3045, 32
        %v3492 = vpop.permute.xlu0 %3491
        %3493 = vrot.lane.b32.xlu0 %v3046, 32
        %v3494 = vpop.permute.xlu0 %3493
        %3495 = vrot.lane.b32.xlu0 %v3047, 32
        %v3496 = vpop.permute.xlu0 %3495
        %3497 = vrot.lane.b32.xlu0 %v3048, 32
        %v3498 = vpop.permute.xlu0 %3497
        %3499 = vrot.lane.b32.xlu0 %v3049, 32
        %v3500 = vpop.permute.xlu0 %3499
        %3501 = vrot.lane.b32.xlu0 %v3050, 32
        %v3502 = vpop.permute.xlu0 %3501
        %3503 = vrot.lane.b32.xlu0 %v3051, 32
        %v3504 = vpop.permute.xlu0 %3503
        %3505 = vrot.lane.b32.xlu0 %v3052, 32
        %v3506 = vpop.permute.xlu0 %3505
        %3507 = vrot.lane.b32.xlu0 %v3053, 32
        %v3508 = vpop.permute.xlu0 %3507
        %3509 = vrot.lane.b32.xlu0 %v3054, 32
        %v3510 = vpop.permute.xlu0 %3509
        %3511 = vrot.lane.b32.xlu0 %v3055, 32
        %v3512 = vpop.permute.xlu0 %3511
        %3513 = vrot.lane.b32.xlu0 %v3056, 32
        %v3514 = vpop.permute.xlu0 %3513
        %3515 = vrot.lane.b32.xlu0 %v3057, 32
        %v3516 = vpop.permute.xlu0 %3515
        %v3517 = vsel %vm3282, %v3454, 0
        %v3519 = vsel %vm3282, %v3456, 0
        %v3521 = vsel %vm3282, %v3458, 0
        %v3523 = vsel %vm3282, %v3460, 0
        %v3525 = vsel %vm3282, %v3462, 0
        %v3527 = vsel %vm3282, %v3464, 0
        %v3529 = vsel %vm3282, %v3466, 0
        %v3531 = vsel %vm3282, %v3468, 0
        %v3533 = vsel %vm3282, %v3470, 0
        %v3535 = vsel %vm3282, %v3472, 0
        %v3537 = vsel %vm3282, %v3474, 0
        %v3539 = vsel %vm3282, %v3476, 0
        %v3541 = vsel %vm3282, %v3478, 0
        %v3543 = vsel %vm3282, %v3480, 0
        %v3545 = vsel %vm3282, %v3482, 0
        %v3547 = vsel %vm3282, %v3484, 0
        %v3549 = vsel %vm3282, %v3486, 0
        %v3551 = vsel %vm3282, %v3488, 0
        %v3553 = vsel %vm3282, %v3490, 0
        %v3555 = vsel %vm3282, %v3492, 0
        %v3557 = vsel %vm3282, %v3494, 0
        %v3559 = vsel %vm3282, %v3496, 0
        %v3561 = vsel %vm3282, %v3498, 0
        %v3563 = vsel %vm3282, %v3500, 0
        %v3565 = vsel %vm3282, %v3502, 0
        %v3567 = vsel %vm3282, %v3504, 0
        %v3569 = vsel %vm3282, %v3506, 0
        %v3571 = vsel %vm3282, %v3508, 0
        %v3573 = vsel %vm3282, %v3510, 0
        %v3575 = vsel %vm3282, %v3512, 0
        %v3577 = vsel %vm3282, %v3514, 0
        %v3579 = vsel %vm3282, %v3516, 0
        %3581 = vmatprep.subr.mxu0 0.0
        %3582 = vmatpush1.xpose.msra.mxu0 %v3517
        %3583 = vmatprep.subr.mxu0 0.0
        %3584 = vmatpush1.xpose.msra.mxu0 %v3519
        %3585 = vmatprep.subr.mxu0 0.0
        %3586 = vmatpush1.xpose.msra.mxu0 %v3521
        %3587 = vmatprep.subr.mxu0 0.0
        %3588 = vmatpush1.xpose.msra.mxu0 %v3523
        %3589 = vmatprep.subr.mxu0 0.0
        %3590 = vmatpush1.xpose.msra.mxu0 %v3525
        %3591 = vmatprep.subr.mxu0 0.0
        %3592 = vmatpush1.xpose.msra.mxu0 %v3527
        %3593 = vmatprep.subr.mxu0 0.0
        %3594 = vmatpush1.xpose.msra.mxu0 %v3529
        %3595 = vmatprep.subr.mxu0 0.0
        %3596 = vmatpush1.xpose.msra.mxu0 %v3531
        %3597 = vmatprep.subr.mxu0 0.0
        %3598 = vmatpush1.xpose.msra.mxu0 %v3533
        %3599 = vmatprep.subr.mxu0 0.0
        %3600 = vmatpush1.xpose.msra.mxu0 %v3535
        %3601 = vmatprep.subr.mxu0 0.0
        %3602 = vmatpush1.xpose.msra.mxu0 %v3537
        %3603 = vmatprep.subr.mxu0 0.0
        %3604 = vmatpush1.xpose.msra.mxu0 %v3539
        %3605 = vmatprep.subr.mxu0 0.0
        %3606 = vmatpush1.xpose.msra.mxu0 %v3541
        %3607 = vmatprep.subr.mxu0 0.0
        %3608 = vmatpush1.xpose.msra.mxu0 %v3543
        %3609 = vmatprep.subr.mxu0 0.0
        %3610 = vmatpush1.xpose.msra.mxu0 %v3545
        %3611 = vmatprep.subr.mxu0 0.0
        %3612 = vmatpush1.xpose.msra.mxu0 %v3547
        %3613 = vmatprep.subr.mxu0 0.0
        %3614 = vmatpush1.xpose.msra.mxu0 %v3549
        %3615 = vmatprep.subr.mxu0 0.0
        %3616 = vmatpush1.xpose.msra.mxu0 %v3551
        %3617 = vmatprep.subr.mxu0 0.0
        %3618 = vmatpush1.xpose.msra.mxu0 %v3553
        %3619 = vmatprep.subr.mxu0 0.0
        %3620 = vmatpush1.xpose.msra.mxu0 %v3555
        %3621 = vmatprep.subr.mxu0 0.0
        %3622 = vmatpush1.xpose.msra.mxu0 %v3557
        %3623 = vmatprep.subr.mxu0 0.0
        %3624 = vmatpush1.xpose.msra.mxu0 %v3559
        %3625 = vmatprep.subr.mxu0 0.0
        %3626 = vmatpush1.xpose.msra.mxu0 %v3561
        %3627 = vmatprep.subr.mxu0 0.0
        %3628 = vmatpush1.xpose.msra.mxu0 %v3563
        %3629 = vmatprep.subr.mxu0 0.0
        %3630 = vmatpush1.xpose.msra.mxu0 %v3565
        %3631 = vmatprep.subr.mxu0 0.0
        %3632 = vmatpush1.xpose.msra.mxu0 %v3567
        %3633 = vmatprep.subr.mxu0 0.0
        %3634 = vmatpush1.xpose.msra.mxu0 %v3569
        %3635 = vmatprep.subr.mxu0 0.0
        %3636 = vmatpush1.xpose.msra.mxu0 %v3571
        %3637 = vmatprep.subr.mxu0 0.0
        %3638 = vmatpush1.xpose.msra.mxu0 %v3573
        %3639 = vmatprep.subr.mxu0 0.0
        %3640 = vmatpush1.xpose.msra.mxu0 %v3575
        %3641 = vmatprep.subr.mxu0 0.0
        %3642 = vmatpush1.xpose.msra.mxu0 %v3577
        %3643 = vmatprep.subr.mxu0 0.0
        %3644 = vmatpush1.xpose.msra.mxu0 %v3579
        %3645 = vmatprep.mubr.f32.mxu0 0.0
        %3646 = vmatmul.mubr.f32.gmra.mrb[0].mxu0 %v3284
        %v3647 = vpop.f32.mrb[0].mxu0
        %v3648 = vadd.f32 %v3417, %v3647
        %v3649 = vpop.f32.mrb[0].mxu0
        %v3650 = vadd.f32 %v3419, %v3649
        %3651 = vdwg.mxu0
        %v3654 = vcombine.low %v3648, %v3650
        %v3656 = vunpack.c.l.s4 1966171168
        %v3657 = vunpack.c.0.s8 %v3656
        %v3658 = vlaneseq
        %v3659 = vshrl.u32 %v3658, 7
        %v3660 = vsub.s32 %v3657, %v3659
        %v3661 = vrot.slane %v3654, %v3660
        %v3663 = vunpack.c.l.s4 1966171168
        %v3664 = vunpack.c.0.s8 %v3663
        %v3665 = vlaneseq
        %v3666 = vshrl.u32 %v3665, 7
        %v3667 = vsub.s32 %v3664, %v3666
        %v3668 = vrot.slane %v3661, %v3667
        %v3670 = vlaneseq
        %vm3671 = vcmp.ge.s32.totalorder %v3670, 0
        %vm3672 = vcmp.lt.s32.totalorder %v3670, 256
        %vm3673 = vmand %vm3671, %vm3672
        %3674 = vst.msk [vmem:[%s137] sm:$0x3] %vm3673, %v3668
        %s3675 = sand.u32 %s71, 1
        %s3676 = scalar_lea.sflag [#allocation3], %s3675
        %s3677 = sand.u32 %s71, 1
        %s3678 = smul.addr %s3677, 2
        %s3679 = scalar_lea.vmem [#allocation2], %s3678
        // Predicated region
        $region29: #{tpu_custom_call.1} parent=27 // pred_check
          %p3680 = pneg %p81
        $region30: #{tpu_custom_call.1} parent=27 // pred_check_branch
          %3682 = sbr.rel (%p3680) target = $region32
        $region31: #{tpu_custom_call.1} parent=27 // pred_region
          %s3683 = smul.u32 2, %s16
          %s3685 = ssub.s32 32, 32
          %3686 = vsyncadd %s3676, %s3685
          %s3687 = smul.addr %s3683, 16
          %s3688 = scalar_lea.hbm %s2, %s3687
          %s3690 = sshll.u32 %s3679, 4
          %s3691 = int_to_ptr.vmem [resolvable:$true] %s3690
          %3693 = dma.vmem_to_hbm [thread:$0]  %s3691, 32, %s3688, %s3676
        $region32: #{tpu_custom_call.1} parent=27 // pred_fallthru
          _
      $region28: #{tpu_custom_call.1} parent=5 // pred_fallthru
        _
      %p3694 = scmp.le.s32.totalorder 2, %s11
      // Predicated region
      $region33: #{tpu_custom_call.1} parent=5 // pred_check
        %p3695 = pneg %p3694
      $region34: #{tpu_custom_call.1} parent=5 // pred_check_branch
        %3697 = sbr.rel (%p3695) target = $region36
      $region35: #{tpu_custom_call.1} parent=5 // pred_region
        %s3698 = ssub.s32 %s11, 2
        // Predicated region
        $region37: #{tpu_custom_call.1} parent=35 // pred_check
          %p3699 = pneg %p87
        $region38: #{tpu_custom_call.1} parent=35 // pred_check_branch
          %3701 = sbr.rel (%p3699) target = $region40
        $region39: #{tpu_custom_call.1} parent=35 // pred_region
          %s3702 = sand.u32 %s72, 1
          %s3703 = scalar_lea.sflag [#allocation3], %s3702
          %s3704 = sand.u32 %s72, 1
          %s3705 = smul.addr %s3704, 2
          %s3706 = scalar_lea.vmem [#allocation2], %s3705
          %3707 = dma.done %s3703, 32
        $region40: #{tpu_custom_call.1} parent=35 // pred_fallthru
          _
      $region36: #{tpu_custom_call.1} parent=5 // pred_fallthru
        _
    $region6: #{tpu_custom_call.1} parent=1 // loop_footer
      %s15 = sadd.s32 1, %s11
    $region7: #{tpu_custom_call.1} parent=1 // loop_footer_branch
      %10 = sbr.rel target = $region3
    $region8: #{tpu_custom_call.1} parent=1 // loop_exit
      _
    %3708 = vsyncpa [#allocation3], 1
    %s3709 = scalar_lea.sflag [#allocation3], 1
    %3710 = vsyncpa %s3709, 1

</llo_original>
